<compile_context>
chip_gen: v6e
topology: v6e:2x2x1
jax: 0.10.0
libtpu: 0.0.40
codegen_flags: <defaults>
</compile_context>

<pallas_src>
import jax
import jax.numpy as jnp
from jax.experimental import pallas as pl
from jax.experimental.pallas import tpu as pltpu


def _round_up(x, m):
    return ((x + m - 1) // m) * m


def _disc_kernel(x_ref, w1_ref, b1_ref, w2_ref, b2_ref, o_ref):
    # x_ref : (tm, Fp)   bf16  one batch tile (features lane-aligned)
    # w1_ref: (Fp, H)    bf16  first linear weight (transposed vs. torch)
    # b1_ref: (1, H)     f32
    # w2_ref: (1, H)     f32   second linear weight as a lane row
    # b2_ref: (1, 1)     f32   SMEM scalar
    # o_ref : (1, tm)    f32   lane-dense output row
    # Linear 1 on the MXU (bf16 inputs, f32 accumulation) + bias.
    h = jnp.dot(x_ref[...], w1_ref[...], preferred_element_type=jnp.float32)
    h = h + b1_ref[...]
    # LeakyReLU(0.01) on the VPU (kept in f32).
    h = jnp.where(h > 0, h, 0.01 * h)
    # Linear 2 as VPU multiply + XLU transpose + sublane reduce -> (1, tm).
    s = h * w2_ref[...]                                  # (tm, H)
    s_t = jnp.transpose(s)                               # (H, tm)
    y = jnp.sum(s_t, axis=0, keepdims=True) + b2_ref[0, 0]   # (1, tm)
    # Sigmoid: exp and approximate reciprocal both live on the EUP slot.
    o_ref[...] = pl.reciprocal(1.0 + jnp.exp(-y), approx=True).astype(o_ref.dtype)


def discriminator_forward(x, w1, b1, w2, b2, *, tm=256):
    """Forward: Linear(F,128) -> LeakyReLU(0.01) -> Linear(128,1) -> Sigmoid.

    x : [B, F] float32
    w1: [F, H] (transposed vs. torch), b1: [H]
    w2: [H, 1] (transposed vs. torch), b2: [1]
    Returns [B, 1] float32 probabilities.
    """
    assert tm % 128 == 0, "batch tile must be a multiple of 128"
    B, F = x.shape
    H = w1.shape[1]

    # Lane-align features; pad/tile the batch axis.
    F_pad = _round_up(F, 128)
    tm_eff = min(tm, _round_up(B, 128))
    B_pad = _round_up(B, tm_eff)

    x_p = jnp.pad(x, ((0, B_pad - B), (0, F_pad - F))).astype(jnp.bfloat16)
    w1_p = jnp.pad(w1, ((0, F_pad - F), (0, 0))).astype(jnp.bfloat16)
    b1_2d = b1.reshape(1, H).astype(jnp.float32)
    w2_row = w2.reshape(1, H).astype(jnp.float32)
    b2_2d = b2.reshape(1, 1).astype(jnp.float32)

    out = pl.pallas_call(
        _disc_kernel,
        out_shape=jax.ShapeDtypeStruct((1, B_pad), jnp.float32),
        grid_spec=pltpu.PrefetchScalarGridSpec(
            num_scalar_prefetch=0,
            grid=(B_pad // tm_eff,),
            in_specs=[
                pl.BlockSpec((tm_eff, F_pad), lambda i: (i, 0)),     # x tile (bf16)
                pl.BlockSpec((F_pad, H), lambda i: (0, 0)),          # w1 (whole, bf16)
                pl.BlockSpec((1, H), lambda i: (0, 0)),              # b1
                pl.BlockSpec((1, H), lambda i: (0, 0)),              # w2 row
                pl.BlockSpec(memory_space=pltpu.MemorySpace.SMEM),   # b2 scalar
            ],
            out_specs=pl.BlockSpec((1, tm_eff), lambda i: (0, i)),   # lane-dense out
        ),
        compiler_params=pltpu.CompilerParams(
            dimension_semantics=("parallel",)),
    )(x_p, w1_p, b1_2d, w2_row, b2_2d)

    return out[0, :B].reshape(B, 1)


def _reference(x, w1, b1, w2, b2):
    h = x @ w1 + b1
    h = jnp.where(h > 0, h, 0.01 * h)
    y = h @ w2 + b2
    return jax.nn.sigmoid(y)


if __name__ == "__main__":
    key = jax.random.PRNGKey(0)
    B = 512            # two grid steps at tm=256
    IN_FEATURES = 784  # flattened 28x28 MNIST image, as in the GAN script
    HIDDEN = 128

    k_x, k_w1, k_b1, k_w2, k_b2 = jax.random.split(key, 5)

    x = jax.random.normal(k_x, (B, IN_FEATURES), dtype=jnp.float32)

    # Parameter init matching torch Linear uniform(-1/sqrt(fan_in), +).
    lim1 = 1.0 / jnp.sqrt(IN_FEATURES)
    w1 = jax.random.uniform(k_w1, (IN_FEATURES, HIDDEN), jnp.float32, -lim1, lim1)
    b1 = jax.random.uniform(k_b1, (HIDDEN,), jnp.float32, -lim1, lim1)
    lim2 = 1.0 / jnp.sqrt(HIDDEN)
    w2 = jax.random.uniform(k_w2, (HIDDEN, 1), jnp.float32, -lim2, lim2)
    b2 = jax.random.uniform(k_b2, (1,), jnp.float32, -lim2, lim2)

    out = discriminator_forward(x, w1, b1, w2, b2)
    out = jax.block_until_ready(out)

    ref = _reference(x, w1, b1, w2, b2)
    assert out.shape == (B, 1)
    # Tolerance loosened vs. f32: bf16 MXU inputs + approx reciprocal.
    assert jnp.allclose(out, ref, atol=2e-2, rtol=2e-2), "mismatch vs reference"

    print("KERNEL_OK")
</pallas_src>

<mosaic_0001>
module attributes {stable_mosaic.version = 11 : i64} {
  func.func @_disc_kernel(%arg0: i32, %arg1: memref<256x896xbf16, #tpu.memory_space<vmem>>, %arg2: memref<896x128xbf16, #tpu.memory_space<vmem>>, %arg3: memref<1x128xf32, #tpu.memory_space<vmem>>, %arg4: memref<1x128xf32, #tpu.memory_space<vmem>>, %arg5: memref<1x1xf32, #tpu.memory_space<smem>>, %arg6: memref<1x256xf32, #tpu.memory_space<vmem>>) attributes {dimension_semantics = [#tpu.dimension_semantics<parallel>], iteration_bounds = array<i64: 2>, scalar_prefetch = 0 : i64, scratch_operands = 0 : i64, tpu.core_type = #tpu.core_type<tc>, window_params = [{transform_indices = @transform_0, window_bounds = array<i64: 256, 896>}, {pipeline_mode = #tpu.pipeline_mode<synchronous>, transform_indices = @transform_1, window_bounds = array<i64: 896, 128>}, {pipeline_mode = #tpu.pipeline_mode<synchronous>, transform_indices = @transform_2, window_bounds = array<i64: 1, 128>}, {pipeline_mode = #tpu.pipeline_mode<synchronous>, transform_indices = @transform_3, window_bounds = array<i64: 1, 128>}, {transform_indices = @transform_4, window_bounds = array<i64: 1, 1>}, {transform_indices = @transform_5, window_bounds = array<i64: 1, 256>}]} {
    %c0 = arith.constant 0 : index
    %c0_0 = arith.constant 0 : index
    %0 = vector.load %arg1[%c0, %c0_0] : memref<256x896xbf16, #tpu.memory_space<vmem>>, vector<256x896xbf16>
    %c0_1 = arith.constant 0 : index
    %c0_2 = arith.constant 0 : index
    %1 = vector.load %arg2[%c0_1, %c0_2] : memref<896x128xbf16, #tpu.memory_space<vmem>>, vector<896x128xbf16>
    %cst = arith.constant dense<0.000000e+00> : vector<256x128xf32>
    %2 = tpu.matmul %0, %1, %cst {dimension_numbers = #tpu.dot_dimension_numbers<[1], [0], [0], [1], [0, 0, 1, 1], [], []>} : vector<256x896xbf16>, vector<896x128xbf16>, vector<256x128xf32> -> vector<256x128xf32>
    %c0_3 = arith.constant 0 : index
    %c0_4 = arith.constant 0 : index
    %3 = vector.load %arg3[%c0_3, %c0_4] : memref<1x128xf32, #tpu.memory_space<vmem>>, vector<1x128xf32>
    %4 = vector.broadcast %3 : vector<1x128xf32> to vector<256x128xf32>
    %5 = arith.addf %2, %4 : vector<256x128xf32>
    %cst_5 = arith.constant 0.000000e+00 : f32
    %6 = vector.broadcast %cst_5 : f32 to vector<256x128xf32>
    %7 = arith.cmpf ogt, %5, %6 : vector<256x128xf32>
    %cst_6 = arith.constant 0.00999999977 : f32
    %8 = vector.broadcast %cst_6 : f32 to vector<256x128xf32>
    %9 = arith.mulf %8, %5 : vector<256x128xf32>
    %10 = arith.select %7, %5, %9 : vector<256x128xi1>, vector<256x128xf32>
    %c0_7 = arith.constant 0 : index
    %c0_8 = arith.constant 0 : index
    %11 = vector.load %arg4[%c0_7, %c0_8] : memref<1x128xf32, #tpu.memory_space<vmem>>, vector<1x128xf32>
    %12 = vector.broadcast %11 : vector<1x128xf32> to vector<256x128xf32>
    %13 = arith.mulf %10, %12 : vector<256x128xf32>
    %14 = tpu.transpose %13, [1, 0] : vector<256x128xf32> -> vector<128x256xf32>
    %cst_9 = arith.constant dense<0.000000e+00> : vector<256xf32>
    %15 = vector.multi_reduction <add>, %14, %cst_9 [0] : vector<128x256xf32> to vector<256xf32>
    %16 = vector.shape_cast %15 : vector<256xf32> to vector<1x256xf32>
    %c0_10 = arith.constant 0 : index
    %c0_11 = arith.constant 0 : index
    %17 = memref.load %arg5[%c0_10, %c0_11] : memref<1x1xf32, #tpu.memory_space<smem>>
    %18 = vector.broadcast %17 : f32 to vector<1x256xf32>
    %19 = arith.addf %16, %18 : vector<1x256xf32>
    %cst_12 = arith.constant 0.000000e+00 : f32
    %20 = vector.broadcast %cst_12 : f32 to vector<1x256xf32>
    %21 = arith.subf %20, %19 : vector<1x256xf32>
    %22 = math.exp %21 : vector<1x256xf32>
    %cst_13 = arith.constant 1.000000e+00 : f32
    %23 = vector.broadcast %cst_13 : f32 to vector<1x256xf32>
    %24 = arith.addf %23, %22 : vector<1x256xf32>
    %25 = tpu.reciprocal %24 {approx = true} : vector<1x256xf32> -> vector<1x256xf32>
    %c0_14 = arith.constant 0 : index
    %c0_15 = arith.constant 0 : index
    %26 = vector.load %arg6[%c0_14, %c0_15] : memref<1x256xf32, #tpu.memory_space<vmem>>, vector<1x256xf32>
    tpu.vector_store %arg6[%c0_14, %c0_15], %25 {strides = array<i32>} : memref<1x256xf32, #tpu.memory_space<vmem>>, vector<1x256xf32>,
    return
  }
  func.func @transform_0(%arg0: i32) -> (i32, i32) {
    %c0_i32 = arith.constant 0 : i32
    %c0_i32_0 = arith.constant 0 : i32
    return %arg0, %c0_i32 : i32, i32
  }
  func.func @transform_1(%arg0: i32) -> (i32, i32) {
    %c0_i32 = arith.constant 0 : i32
    %c0_i32_0 = arith.constant 0 : i32
    %c0_i32_1 = arith.constant 0 : i32
    return %c0_i32, %c0_i32_0 : i32, i32
  }
  func.func @transform_2(%arg0: i32) -> (i32, i32) {
    %c0_i32 = arith.constant 0 : i32
    %c0_i32_0 = arith.constant 0 : i32
    %c0_i32_1 = arith.constant 0 : i32
    return %c0_i32, %c0_i32_0 : i32, i32
  }
  func.func @transform_3(%arg0: i32) -> (i32, i32) {
    %c0_i32 = arith.constant 0 : i32
    %c0_i32_0 = arith.constant 0 : i32
    %c0_i32_1 = arith.constant 0 : i32
    return %c0_i32, %c0_i32_0 : i32, i32
  }
  func.func @transform_4(%arg0: i32) -> (i32, i32) {
    %c0_i32 = arith.constant 0 : i32
    %c0_i32_0 = arith.constant 0 : i32
    %c0_i32_1 = arith.constant 0 : i32
    return %c0_i32, %c0_i32_0 : i32, i32
  }
  func.func @transform_5(%arg0: i32) -> (i32, i32) {
    %c0_i32 = arith.constant 0 : i32
    %c0_i32_0 = arith.constant 0 : i32
    return %c0_i32, %arg0 : i32, i32
  }
}

</mosaic_0001>

<llo_original>
// kernel: tpu_custom_call.1
$region0: #{tpu_custom_call.1}
  #allocation0 [shape = 'u32[]', space=smem, size = 0x4, offset = 0x4, fixed_abs, tag = 'smem constant byte address 0x4 - core index']
  #allocation1 [shape = 'u32[144,128]{1,0:T(1,128)}', space=vmem, size = 0x12000, scoped, tag = 'internal scratch']
  #allocation2 [shape = 'f32[1,1]{1,0:T(1,128)S(6)}', space=smem, size = 0x200, scoped, tag = 'scoped memory for tpu_custom_call.1']
  %s0 = inlined_call_operand.hbm [shape: bf16[512,896], index: 0, kind: input, shape index: {}]
  %s1 = inlined_call_operand.hbm [shape: bf16[896,128], index: 1, kind: input, shape index: {}]
  %s2 = inlined_call_operand.vmem [shape: f32[1,128], index: 2, kind: input, shape index: {}]
  %s3 = inlined_call_operand.vmem [shape: f32[1,128], index: 3, kind: input, shape index: {}]
  %s4 = inlined_call_operand.<no memory space> [shape: f32[1,1], index: 4, kind: input, shape index: {}]
  %s5 = inlined_call_operand.hbm [shape: f32[1,512], index: 5, kind: output, shape index: {}]
  %s6 = sld [smem:[#allocation0]]
  $region61: #{tpu_custom_call.1} parent=0
    _
  %s8 = ssub.s32 1, %s6
  %s9 = scalar_select 0, %s8, %s6
  %10 = sst [smem:[#allocation2]] %s4
  $region1: #{tpu_custom_call.1} parent=0
    #allocation3 [shape = 'u8[917504]{0}', space=vmem, size = 0xe0000, scoped, tag = 'input window, operand 0']
    #allocation4 [shape = 's32[2]{0}', space=sflag, size = 0x8, scoped, tag = 'scoped memory for tpu_custom_call.1']
    #allocation5 [shape = 's32[2]{0}', space=sflag, size = 0x8, scoped, tag = 'scoped memory for tpu_custom_call.1']
    #allocation6 [shape = 'u8[229376]{0}', space=vmem, size = 0x38000, scoped, tag = 'input window, operand 1, single buffered']
    #allocation7 [shape = 's32[1]{0}', space=sflag, size = 0x4, scoped, tag = 'scoped memory for tpu_custom_call.1']
    #allocation8 [shape = 'u8[2048]{0}', space=vmem, size = 0x800, scoped, tag = 'output window, operand 0']
    %11 = vsyncpa [#allocation4], 0
    %s12 = scalar_lea.sflag [#allocation4], 1
    %13 = vsyncpa %s12, 0
    %14 = vsyncpa [#allocation7], 0
    %15 = vsyncpa [#allocation5], 0
    %s16 = scalar_lea.sflag [#allocation5], 1
    %17 = vsyncpa %s16, 0
    loop: start=0, step=1, limit=4
    $region2: #{tpu_custom_call.1} parent=1 // loop_pre_header
      _
    $region3: #{tpu_custom_call.1} parent=1 // loop_header
      %s19 = sphi 0, %s23
      %p20 = scmp.ge.s32.totalorder %s19, 4
      %s29 = sphi 0, %s31
      %s32 = sphi 0, %s29
      %s33 = sphi 0, %s32
      %s49 = sphi 0, %s33
      %s53 = sphi 0, %s53
      %s55 = sphi 0, %s53
      %s56 = sphi 0, %s55
      %s70 = sphi 0, %s56
      %s74 = sphi 0, %s74
      %s76 = sphi 0, %s74
      %s77 = sphi 0, %s76
      %s91 = sphi 0, %s77
      %s95 = sphi 0, %s95
      %s97 = sphi 0, %s95
      %s98 = sphi 0, %s97
      %s112 = sphi 0, %s98
      %s116 = sphi 0, %s116
      %s118 = sphi 0, %s116
      %s119 = sphi 0, %s118
      %s133 = sphi 0, %s119
      %s139 = sphi 0, %s141
      %s142 = sphi 0, %s139
      %s143 = sphi 0, %s142
      %s159 = sphi 0, %s143
    $region4: #{tpu_custom_call.1} parent=1 // loop_header_branch
      %22 = sbr.rel (%p20) target = $region8
    $region5: #{tpu_custom_call.1} parent=1 // loop_body
      %s24 = ssub.s32 %s19, 1
      %s25 = ssub.s32 %s19, 2
      %s26 = sadd.s32 %s19, 1
      %s27 = ssub.s32 %s19, %s26
      %p28 = scmp.eq.s32.totalorder %s27, 0
      %s30 = sadd.s32 %s29, 1
      %s31 = scalar_select %p28, %s29, %s30
      %p34 = pneg %p28
      %p35 = scmp.eq.s32.totalorder %s19, 1
      %p36 = por %p34, %p35
      %p37 = scmp.ne.s32.totalorder %s29, %s32
      %p38 = scmp.eq.s32.totalorder %s19, 0
      %p39 = por %p37, %p38
      %p40 = scmp.ne.s32.totalorder %s29, %s32
      %p41 = scmp.eq.s32.totalorder %s24, 1
      %p42 = por %p40, %p41
      %p43 = scmp.ne.s32.totalorder %s32, %s33
      %p44 = scmp.eq.s32.totalorder %s24, 0
      %p45 = por %p43, %p44
      %p46 = scmp.ne.s32.totalorder %s32, %s33
      %p47 = scmp.eq.s32.totalorder %s25, 1
      %p48 = por %p46, %p47
      %p50 = scmp.ne.s32.totalorder %s33, %s49
      %p51 = scmp.eq.s32.totalorder %s25, 0
      %p52 = por %p50, %p51
      %s54 = sadd.s32 %s53, 1
      %p57 = scmp.eq.s32.totalorder %s19, 1
      %p58 = scmp.ne.s32.totalorder %s53, %s55
      %p59 = scmp.eq.s32.totalorder %s19, 0
      %p60 = por %p58, %p59
      %p61 = scmp.ne.s32.totalorder %s53, %s55
      %p62 = scmp.eq.s32.totalorder %s24, 1
      %p63 = por %p61, %p62
      %p64 = scmp.ne.s32.totalorder %s55, %s56
      %p65 = scmp.eq.s32.totalorder %s24, 0
      %p66 = por %p64, %p65
      %p67 = scmp.ne.s32.totalorder %s55, %s56
      %p68 = scmp.eq.s32.totalorder %s25, 1
      %p69 = por %p67, %p68
      %p71 = scmp.ne.s32.totalorder %s56, %s70
      %p72 = scmp.eq.s32.totalorder %s25, 0
      %p73 = por %p71, %p72
      %s75 = sadd.s32 %s74, 1
      %p78 = scmp.eq.s32.totalorder %s19, 1
      %p79 = scmp.ne.s32.totalorder %s74, %s76
      %p80 = scmp.eq.s32.totalorder %s19, 0
      %p81 = por %p79, %p80
      %p82 = scmp.ne.s32.totalorder %s74, %s76
      %p83 = scmp.eq.s32.totalorder %s24, 1
      %p84 = por %p82, %p83
      %p85 = scmp.ne.s32.totalorder %s76, %s77
      %p86 = scmp.eq.s32.totalorder %s24, 0
      %p87 = por %p85, %p86
      %p88 = scmp.ne.s32.totalorder %s76, %s77
      %p89 = scmp.eq.s32.totalorder %s25, 1
      %p90 = por %p88, %p89
      %p92 = scmp.ne.s32.totalorder %s77, %s91
      %p93 = scmp.eq.s32.totalorder %s25, 0
      %p94 = por %p92, %p93
      %s96 = sadd.s32 %s95, 1
      %p99 = scmp.eq.s32.totalorder %s19, 1
      %p100 = scmp.ne.s32.totalorder %s95, %s97
      %p101 = scmp.eq.s32.totalorder %s19, 0
      %p102 = por %p100, %p101
      %p103 = scmp.ne.s32.totalorder %s95, %s97
      %p104 = scmp.eq.s32.totalorder %s24, 1
      %p105 = por %p103, %p104
      %p106 = scmp.ne.s32.totalorder %s97, %s98
      %p107 = scmp.eq.s32.totalorder %s24, 0
      %p108 = por %p106, %p107
      %p109 = scmp.ne.s32.totalorder %s97, %s98
      %p110 = scmp.eq.s32.totalorder %s25, 1
      %p111 = por %p109, %p110
      %p113 = scmp.ne.s32.totalorder %s98, %s112
      %p114 = scmp.eq.s32.totalorder %s25, 0
      %p115 = por %p113, %p114
      %s117 = sadd.s32 %s116, 1
      %p120 = scmp.eq.s32.totalorder %s19, 1
      %p121 = scmp.ne.s32.totalorder %s116, %s118
      %p122 = scmp.eq.s32.totalorder %s19, 0
      %p123 = por %p121, %p122
      %p124 = scmp.ne.s32.totalorder %s116, %s118
      %p125 = scmp.eq.s32.totalorder %s24, 1
      %p126 = por %p124, %p125
      %p127 = scmp.ne.s32.totalorder %s118, %s119
      %p128 = scmp.eq.s32.totalorder %s24, 0
      %p129 = por %p127, %p128
      %p130 = scmp.ne.s32.totalorder %s118, %s119
      %p131 = scmp.eq.s32.totalorder %s25, 1
      %p132 = por %p130, %p131
      %p134 = scmp.ne.s32.totalorder %s119, %s133
      %p135 = scmp.eq.s32.totalorder %s25, 0
      %p136 = por %p134, %p135
      %s137 = ssub.s32 %s19, %s26
      %p138 = scmp.eq.s32.totalorder %s137, 0
      %s140 = sadd.s32 %s139, 1
      %s141 = scalar_select %p138, %s139, %s140
      %p144 = pneg %p138
      %p145 = scmp.eq.s32.totalorder %s19, 1
      %p146 = por %p144, %p145
      %p147 = scmp.ne.s32.totalorder %s139, %s142
      %p148 = scmp.eq.s32.totalorder %s19, 0
      %p149 = por %p147, %p148
      %p150 = scmp.ne.s32.totalorder %s139, %s142
      %p151 = scmp.eq.s32.totalorder %s24, 1
      %p152 = por %p150, %p151
      %p153 = scmp.ne.s32.totalorder %s142, %s143
      %p154 = scmp.eq.s32.totalorder %s24, 0
      %p155 = por %p153, %p154
      %p156 = scmp.ne.s32.totalorder %s142, %s143
      %p157 = scmp.eq.s32.totalorder %s25, 1
      %p158 = por %p156, %p157
      %p160 = scmp.ne.s32.totalorder %s143, %s159
      %p161 = scmp.eq.s32.totalorder %s25, 0
      %p162 = por %p160, %p161
      %p163 = scmp.le.s32.totalorder 1, %s19
      %p164 = scmp.lt.s32.totalorder %s19, 3
      %p165 = pnand %p163, %p164
      %p166 = pneg %p165
      // Predicated region
      $region9: #{tpu_custom_call.1} parent=5 // pred_check
        _
      $region10: #{tpu_custom_call.1} parent=5 // pred_check_branch
        %168 = sbr.rel (%p165) target = $region12
      $region11: #{tpu_custom_call.1} parent=5 // pred_region
        %s169 = ssub.s32 %s19, 1
        // Predicated region
        $region13: #{tpu_custom_call.1} parent=11 // pred_check
          %p170 = pneg %p66
        $region14: #{tpu_custom_call.1} parent=11 // pred_check_branch
          %172 = sbr.rel (%p170) target = $region16
        $region15: #{tpu_custom_call.1} parent=11 // pred_region
          %s174 = ssub.s32 7168, 7168
          %175 = vsyncadd [#allocation7], %s174
          %s176 = sshll.u32 [#allocation6], 4
          %s177 = int_to_ptr.vmem [resolvable:$true] %s176
          %182 = dma.hbm_to_vmem [thread:$0]  %s1, 7168, %s177, [#allocation7], 64, 64, 4
        $region16: #{tpu_custom_call.1} parent=11 // pred_fallthru
          _
        // Predicated region
        $region17: #{tpu_custom_call.1} parent=11 // pred_check
          %p183 = pneg %p87
        $region18: #{tpu_custom_call.1} parent=11 // pred_check_branch
          %185 = sbr.rel (%p183) target = $region20
        $region19: #{tpu_custom_call.1} parent=11 // pred_region
          _
        $region20: #{tpu_custom_call.1} parent=11 // pred_fallthru
          _
        // Predicated region
        $region21: #{tpu_custom_call.1} parent=11 // pred_check
          %p186 = pneg %p108
        $region22: #{tpu_custom_call.1} parent=11 // pred_check_branch
          %188 = sbr.rel (%p186) target = $region24
        $region23: #{tpu_custom_call.1} parent=11 // pred_region
          _
        $region24: #{tpu_custom_call.1} parent=11 // pred_fallthru
          _
        // Predicated region
        $region25: #{tpu_custom_call.1} parent=11 // pred_check
          %p189 = pneg %p129
        $region26: #{tpu_custom_call.1} parent=11 // pred_check_branch
          %191 = sbr.rel (%p189) target = $region28
        $region27: #{tpu_custom_call.1} parent=11 // pred_region
          _
        $region28: #{tpu_custom_call.1} parent=11 // pred_fallthru
          _
      $region12: #{tpu_custom_call.1} parent=5 // pred_fallthru
        _
      %p192 = scmp.lt.s32.totalorder %s19, 2
      // Predicated region
      $region29: #{tpu_custom_call.1} parent=5 // pred_check
        %p193 = pneg %p192
      $region30: #{tpu_custom_call.1} parent=5 // pred_check_branch
        %195 = sbr.rel (%p193) target = $region32
      $region31: #{tpu_custom_call.1} parent=5 // pred_region
        // Predicated region
        $region33: #{tpu_custom_call.1} parent=31 // pred_check
          %p196 = pneg %p39
        $region34: #{tpu_custom_call.1} parent=31 // pred_check_branch
          %198 = sbr.rel (%p196) target = $region36
        $region35: #{tpu_custom_call.1} parent=31 // pred_region
          %s199 = sand.u32 %s29, 1
          %s200 = scalar_lea.sflag [#allocation4], %s199
          %s201 = sand.u32 %s29, 1
          %s202 = smul.addr %s201, 896
          %s203 = scalar_lea.vmem [#allocation3], %s202
          %s204 = smul.u32 32, %s19
          %s206 = ssub.s32 14336, 14336
          %207 = vsyncadd %s200, %s206
          %s208 = smul.addr %s204, 7
          %s209 = smul.addr %s208, 64
          %s210 = scalar_lea.hbm %s0, %s209
          %s211 = sshll.u32 %s203, 4
          %s212 = int_to_ptr.vmem [resolvable:$true] %s211
          %217 = dma.hbm_to_vmem [thread:$0]  %s210, 14336, %s212, %s200, 448, 448, 28
        $region36: #{tpu_custom_call.1} parent=31 // pred_fallthru
          _
      $region32: #{tpu_custom_call.1} parent=5 // pred_fallthru
        _
      %p218 = scmp.le.s32.totalorder 1, %s19
      %p219 = scmp.lt.s32.totalorder %s19, 3
      %p220 = pnand %p218, %p219
      %p221 = pneg %p220
      // Predicated region
      $region37: #{tpu_custom_call.1} parent=5 // pred_check
        _
      $region38: #{tpu_custom_call.1} parent=5 // pred_check_branch
        %223 = sbr.rel (%p220) target = $region40
      $region39: #{tpu_custom_call.1} parent=5 // pred_region
        %s224 = ssub.s32 %s19, 1
        %s225 = sand.u32 %s32, 1
        %s226 = scalar_lea.sflag [#allocation4], %s225
        %s227 = sand.u32 %s32, 1
        %s228 = smul.addr %s227, 896
        %s229 = scalar_lea.vmem [#allocation3], %s228
        // Predicated region
        $region41: #{tpu_custom_call.1} parent=39 // pred_check
          %p230 = pneg %p45
        $region42: #{tpu_custom_call.1} parent=39 // pred_check_branch
          %232 = sbr.rel (%p230) target = $region44
        $region43: #{tpu_custom_call.1} parent=39 // pred_region
          %233 = dma.done %s226, 14336
        $region44: #{tpu_custom_call.1} parent=39 // pred_fallthru
          _
        // Predicated region
        $region45: #{tpu_custom_call.1} parent=39 // pred_check
          %p234 = pneg %p66
        $region46: #{tpu_custom_call.1} parent=39 // pred_check_branch
          %236 = sbr.rel (%p234) target = $region48
        $region47: #{tpu_custom_call.1} parent=39 // pred_region
          %237 = dma.done [#allocation7], 7168
        $region48: #{tpu_custom_call.1} parent=39 // pred_fallthru
          _
        %s238 = sand.u32 %s32, 1
        %s239 = scalar_lea.sflag [#allocation4], %s238
        %s240 = sand.u32 %s32, 1
        %s241 = smul.addr %s240, 896
        %s242 = scalar_lea.vmem [#allocation3], %s241
        %p243 = pneg %p45
        %p244 = pneg %p42
        %p245 = pneg %p66
        %p246 = pneg %p63
        %p247 = pneg %p87
        %p248 = pneg %p84
        %p249 = pneg %p108
        %p250 = pneg %p105
        %p251 = pneg %p129
        %p252 = pneg %p126
        %p253 = pneg %p155
        %p254 = pneg %p152
        %s255 = sand.u32 %s142, 1
        %s256 = scalar_lea.sflag [#allocation5], %s255
        %s257 = sand.u32 %s142, 1
        %s258 = smul.addr %s257, 2
        %s259 = scalar_lea.vmem [#allocation8], %s258
        %s260 = smul.u32 32, %s24
        %s261 = smul.u32 2, %s24
        %v263 = vld [vmem:[%s229] sm:$0xff]
        %v264 = vld [vmem:[%s229 + $0x8] sm:$0xff]
        %v265 = vld [vmem:[%s229 + $0x10] sm:$0xff]
        %v266 = vld [vmem:[%s229 + $0x18] sm:$0xf]
        %v267 = vld [vmem:[%s229 + $0x1c] sm:$0xff]
        %v268 = vld [vmem:[%s229 + $0x24] sm:$0xff]
        %v269 = vld [vmem:[%s229 + $0x2c] sm:$0xff]
        %v270 = vld [vmem:[%s229 + $0x34] sm:$0xf]
        %v271 = vld [vmem:[%s229 + $0x38] sm:$0xff]
        %v272 = vld [vmem:[%s229 + $0x40] sm:$0xff]
        %v273 = vld [vmem:[%s229 + $0x48] sm:$0xff]
        %v274 = vld [vmem:[%s229 + $0x50] sm:$0xf]
        %v275 = vld [vmem:[%s229 + $0x54] sm:$0xff]
        %v276 = vld [vmem:[%s229 + $0x5c] sm:$0xff]
        %v277 = vld [vmem:[%s229 + $0x64] sm:$0xff]
        %v278 = vld [vmem:[%s229 + $0x6c] sm:$0xf]
        %v279 = vld [vmem:[%s229 + $0x70] sm:$0xff]
        %v280 = vld [vmem:[%s229 + $0x78] sm:$0xff]
        %v281 = vld [vmem:[%s229 + $0x80] sm:$0xff]
        %v282 = vld [vmem:[%s229 + $0x88] sm:$0xf]
        %v283 = vld [vmem:[%s229 + $0x8c] sm:$0xff]
        %v284 = vld [vmem:[%s229 + $0x94] sm:$0xff]
        %v285 = vld [vmem:[%s229 + $0x9c] sm:$0xff]
        %v286 = vld [vmem:[%s229 + $0xa4] sm:$0xf]
        %v287 = vld [vmem:[%s229 + $0xa8] sm:$0xff]
        %v288 = vld [vmem:[%s229 + $0xb0] sm:$0xff]
        %v289 = vld [vmem:[%s229 + $0xb8] sm:$0xff]
        %v290 = vld [vmem:[%s229 + $0xc0] sm:$0xf]
        %v291 = vld [vmem:[%s229 + $0xc4] sm:$0xff]
        %v292 = vld [vmem:[%s229 + $0xcc] sm:$0xff]
        %v293 = vld [vmem:[%s229 + $0xd4] sm:$0xff]
        %v294 = vld [vmem:[%s229 + $0xdc] sm:$0xf]
        %v295 = vld [vmem:[%s229 + $0xe0] sm:$0xff]
        %v296 = vld [vmem:[%s229 + $0xe8] sm:$0xff]
        %v297 = vld [vmem:[%s229 + $0xf0] sm:$0xff]
        %v298 = vld [vmem:[%s229 + $0xf8] sm:$0xf]
        %v299 = vld [vmem:[%s229 + $0xfc] sm:$0xff]
        %v300 = vld [vmem:[%s229 + $0x104] sm:$0xff]
        %v301 = vld [vmem:[%s229 + $0x10c] sm:$0xff]
        %v302 = vld [vmem:[%s229 + $0x114] sm:$0xf]
        %v303 = vld [vmem:[%s229 + $0x118] sm:$0xff]
        %v304 = vld [vmem:[%s229 + $0x120] sm:$0xff]
        %v305 = vld [vmem:[%s229 + $0x128] sm:$0xff]
        %v306 = vld [vmem:[%s229 + $0x130] sm:$0xf]
        %v307 = vld [vmem:[%s229 + $0x134] sm:$0xff]
        %v308 = vld [vmem:[%s229 + $0x13c] sm:$0xff]
        %v309 = vld [vmem:[%s229 + $0x144] sm:$0xff]
        %v310 = vld [vmem:[%s229 + $0x14c] sm:$0xf]
        %v311 = vld [vmem:[%s229 + $0x150] sm:$0xff]
        %v312 = vld [vmem:[%s229 + $0x158] sm:$0xff]
        %v313 = vld [vmem:[%s229 + $0x160] sm:$0xff]
        %v314 = vld [vmem:[%s229 + $0x168] sm:$0xf]
        %v315 = vld [vmem:[%s229 + $0x16c] sm:$0xff]
        %v316 = vld [vmem:[%s229 + $0x174] sm:$0xff]
        %v317 = vld [vmem:[%s229 + $0x17c] sm:$0xff]
        %v318 = vld [vmem:[%s229 + $0x184] sm:$0xf]
        %v319 = vld [vmem:[%s229 + $0x188] sm:$0xff]
        %v320 = vld [vmem:[%s229 + $0x190] sm:$0xff]
        %v321 = vld [vmem:[%s229 + $0x198] sm:$0xff]
        %v322 = vld [vmem:[%s229 + $0x1a0] sm:$0xf]
        %v323 = vld [vmem:[%s229 + $0x1a4] sm:$0xff]
        %v324 = vld [vmem:[%s229 + $0x1ac] sm:$0xff]
        %v325 = vld [vmem:[%s229 + $0x1b4] sm:$0xff]
        %v326 = vld [vmem:[%s229 + $0x1bc] sm:$0xf]
        %v327 = vld [vmem:[%s229 + $0x1c0] sm:$0xff]
        %v328 = vld [vmem:[%s229 + $0x1c8] sm:$0xff]
        %v329 = vld [vmem:[%s229 + $0x1d0] sm:$0xff]
        %v330 = vld [vmem:[%s229 + $0x1d8] sm:$0xf]
        %v331 = vld [vmem:[%s229 + $0x1dc] sm:$0xff]
        %v332 = vld [vmem:[%s229 + $0x1e4] sm:$0xff]
        %v333 = vld [vmem:[%s229 + $0x1ec] sm:$0xff]
        %v334 = vld [vmem:[%s229 + $0x1f4] sm:$0xf]
        %v335 = vld [vmem:[%s229 + $0x1f8] sm:$0xff]
        %v336 = vld [vmem:[%s229 + $0x200] sm:$0xff]
        %v337 = vld [vmem:[%s229 + $0x208] sm:$0xff]
        %v338 = vld [vmem:[%s229 + $0x210] sm:$0xf]
        %v339 = vld [vmem:[%s229 + $0x214] sm:$0xff]
        %v340 = vld [vmem:[%s229 + $0x21c] sm:$0xff]
        %v341 = vld [vmem:[%s229 + $0x224] sm:$0xff]
        %v342 = vld [vmem:[%s229 + $0x22c] sm:$0xf]
        %v343 = vld [vmem:[%s229 + $0x230] sm:$0xff]
        %v344 = vld [vmem:[%s229 + $0x238] sm:$0xff]
        %v345 = vld [vmem:[%s229 + $0x240] sm:$0xff]
        %v346 = vld [vmem:[%s229 + $0x248] sm:$0xf]
        %v347 = vld [vmem:[%s229 + $0x24c] sm:$0xff]
        %v348 = vld [vmem:[%s229 + $0x254] sm:$0xff]
        %v349 = vld [vmem:[%s229 + $0x25c] sm:$0xff]
        %v350 = vld [vmem:[%s229 + $0x264] sm:$0xf]
        %v351 = vld [vmem:[%s229 + $0x268] sm:$0xff]
        %v352 = vld [vmem:[%s229 + $0x270] sm:$0xff]
        %v353 = vld [vmem:[%s229 + $0x278] sm:$0xff]
        %v354 = vld [vmem:[%s229 + $0x280] sm:$0xf]
        %v355 = vld [vmem:[%s229 + $0x284] sm:$0xff]
        %v356 = vld [vmem:[%s229 + $0x28c] sm:$0xff]
        %v357 = vld [vmem:[%s229 + $0x294] sm:$0xff]
        %v358 = vld [vmem:[%s229 + $0x29c] sm:$0xf]
        %v359 = vld [vmem:[%s229 + $0x2a0] sm:$0xff]
        %v360 = vld [vmem:[%s229 + $0x2a8] sm:$0xff]
        %v361 = vld [vmem:[%s229 + $0x2b0] sm:$0xff]
        %v362 = vld [vmem:[%s229 + $0x2b8] sm:$0xf]
        %v363 = vld [vmem:[%s229 + $0x2bc] sm:$0xff]
        %v364 = vld [vmem:[%s229 + $0x2c4] sm:$0xff]
        %v365 = vld [vmem:[%s229 + $0x2cc] sm:$0xff]
        %v366 = vld [vmem:[%s229 + $0x2d4] sm:$0xf]
        %v367 = vld [vmem:[%s229 + $0x2d8] sm:$0xff]
        %v368 = vld [vmem:[%s229 + $0x2e0] sm:$0xff]
        %v369 = vld [vmem:[%s229 + $0x2e8] sm:$0xff]
        %v370 = vld [vmem:[%s229 + $0x2f0] sm:$0xf]
        %v371 = vld [vmem:[%s229 + $0x2f4] sm:$0xff]
        %v372 = vld [vmem:[%s229 + $0x2fc] sm:$0xff]
        %v373 = vld [vmem:[%s229 + $0x304] sm:$0xff]
        %v374 = vld [vmem:[%s229 + $0x30c] sm:$0xf]
        %v375 = vld [vmem:[%s229 + $0x310] sm:$0xff]
        %v376 = vld [vmem:[%s229 + $0x318] sm:$0xff]
        %v377 = vld [vmem:[%s229 + $0x320] sm:$0xff]
        %v378 = vld [vmem:[%s229 + $0x328] sm:$0xf]
        %v379 = vld [vmem:[%s229 + $0x32c] sm:$0xff]
        %v380 = vld [vmem:[%s229 + $0x334] sm:$0xff]
        %v381 = vld [vmem:[%s229 + $0x33c] sm:$0xff]
        %v382 = vld [vmem:[%s229 + $0x344] sm:$0xf]
        %v383 = vld [vmem:[%s229 + $0x348] sm:$0xff]
        %v384 = vld [vmem:[%s229 + $0x350] sm:$0xff]
        %v385 = vld [vmem:[%s229 + $0x358] sm:$0xff]
        %v386 = vld [vmem:[%s229 + $0x360] sm:$0xf]
        %v387 = vld [vmem:[%s229 + $0x364] sm:$0xff]
        %v388 = vld [vmem:[%s229 + $0x36c] sm:$0xff]
        %v389 = vld [vmem:[%s229 + $0x374] sm:$0xff]
        %v390 = vld [vmem:[%s229 + $0x37c] sm:$0xf]
        %v391 = vld [vmem:[#allocation6] sm:$0xf]
        %v392 = vld [vmem:[#allocation6 + $0x4] sm:$0xf]
        %v393 = vld [vmem:[#allocation6 + $0x8] sm:$0xf]
        %v394 = vld [vmem:[#allocation6 + $0xc] sm:$0xf]
        %v395 = vld [vmem:[#allocation6 + $0x10] sm:$0xf]
        %v396 = vld [vmem:[#allocation6 + $0x14] sm:$0xf]
        %v397 = vld [vmem:[#allocation6 + $0x18] sm:$0xf]
        %v398 = vld [vmem:[#allocation6 + $0x1c] sm:$0xf]
        %v399 = vld [vmem:[#allocation6 + $0x20] sm:$0xf]
        %v400 = vld [vmem:[#allocation6 + $0x24] sm:$0xf]
        %v401 = vld [vmem:[#allocation6 + $0x28] sm:$0xf]
        %v402 = vld [vmem:[#allocation6 + $0x2c] sm:$0xf]
        %v403 = vld [vmem:[#allocation6 + $0x30] sm:$0xf]
        %v404 = vld [vmem:[#allocation6 + $0x34] sm:$0xf]
        %v405 = vld [vmem:[#allocation6 + $0x38] sm:$0xf]
        %v406 = vld [vmem:[#allocation6 + $0x3c] sm:$0xf]
        %v407 = vld [vmem:[#allocation6 + $0x40] sm:$0xf]
        %v408 = vld [vmem:[#allocation6 + $0x44] sm:$0xf]
        %v409 = vld [vmem:[#allocation6 + $0x48] sm:$0xf]
        %v410 = vld [vmem:[#allocation6 + $0x4c] sm:$0xf]
        %v411 = vld [vmem:[#allocation6 + $0x50] sm:$0xf]
        %v412 = vld [vmem:[#allocation6 + $0x54] sm:$0xf]
        %v413 = vld [vmem:[#allocation6 + $0x58] sm:$0xf]
        %v414 = vld [vmem:[#allocation6 + $0x5c] sm:$0xf]
        %v415 = vld [vmem:[#allocation6 + $0x60] sm:$0xf]
        %v416 = vld [vmem:[#allocation6 + $0x64] sm:$0xf]
        %v417 = vld [vmem:[#allocation6 + $0x68] sm:$0xf]
        %v418 = vld [vmem:[#allocation6 + $0x6c] sm:$0xf]
        %v419 = vld [vmem:[#allocation6 + $0x70] sm:$0xf]
        %v420 = vld [vmem:[#allocation6 + $0x74] sm:$0xf]
        %v421 = vld [vmem:[#allocation6 + $0x78] sm:$0xf]
        %v422 = vld [vmem:[#allocation6 + $0x7c] sm:$0xf]
        %v423 = vld [vmem:[#allocation6 + $0x80] sm:$0xf]
        %v424 = vld [vmem:[#allocation6 + $0x84] sm:$0xf]
        %v425 = vld [vmem:[#allocation6 + $0x88] sm:$0xf]
        %v426 = vld [vmem:[#allocation6 + $0x8c] sm:$0xf]
        %v427 = vld [vmem:[#allocation6 + $0x90] sm:$0xf]
        %v428 = vld [vmem:[#allocation6 + $0x94] sm:$0xf]
        %v429 = vld [vmem:[#allocation6 + $0x98] sm:$0xf]
        %v430 = vld [vmem:[#allocation6 + $0x9c] sm:$0xf]
        %v431 = vld [vmem:[#allocation6 + $0xa0] sm:$0xf]
        %v432 = vld [vmem:[#allocation6 + $0xa4] sm:$0xf]
        %v433 = vld [vmem:[#allocation6 + $0xa8] sm:$0xf]
        %v434 = vld [vmem:[#allocation6 + $0xac] sm:$0xf]
        %v435 = vld [vmem:[#allocation6 + $0xb0] sm:$0xf]
        %v436 = vld [vmem:[#allocation6 + $0xb4] sm:$0xf]
        %v437 = vld [vmem:[#allocation6 + $0xb8] sm:$0xf]
        %v438 = vld [vmem:[#allocation6 + $0xbc] sm:$0xf]
        %v439 = vld [vmem:[#allocation6 + $0xc0] sm:$0xf]
        %v440 = vld [vmem:[#allocation6 + $0xc4] sm:$0xf]
        %v441 = vld [vmem:[#allocation6 + $0xc8] sm:$0xf]
        %v442 = vld [vmem:[#allocation6 + $0xcc] sm:$0xf]
        %v443 = vld [vmem:[#allocation6 + $0xd0] sm:$0xf]
        %v444 = vld [vmem:[#allocation6 + $0xd4] sm:$0xf]
        %v445 = vld [vmem:[#allocation6 + $0xd8] sm:$0xf]
        %v446 = vld [vmem:[#allocation6 + $0xdc] sm:$0xf]
        %v447 = vld [vmem:[#allocation6 + $0xe0] sm:$0xf]
        %v448 = vld [vmem:[#allocation6 + $0xe4] sm:$0xf]
        %v449 = vld [vmem:[#allocation6 + $0xe8] sm:$0xf]
        %v450 = vld [vmem:[#allocation6 + $0xec] sm:$0xf]
        %v451 = vld [vmem:[#allocation6 + $0xf0] sm:$0xf]
        %v452 = vld [vmem:[#allocation6 + $0xf4] sm:$0xf]
        %v453 = vld [vmem:[#allocation6 + $0xf8] sm:$0xf]
        %v454 = vld [vmem:[#allocation6 + $0xfc] sm:$0xf]
        %v455 = vld [vmem:[#allocation6 + $0x100] sm:$0xf]
        %v456 = vld [vmem:[#allocation6 + $0x104] sm:$0xf]
        %v457 = vld [vmem:[#allocation6 + $0x108] sm:$0xf]
        %v458 = vld [vmem:[#allocation6 + $0x10c] sm:$0xf]
        %v459 = vld [vmem:[#allocation6 + $0x110] sm:$0xf]
        %v460 = vld [vmem:[#allocation6 + $0x114] sm:$0xf]
        %v461 = vld [vmem:[#allocation6 + $0x118] sm:$0xf]
        %v462 = vld [vmem:[#allocation6 + $0x11c] sm:$0xf]
        %v463 = vld [vmem:[#allocation6 + $0x120] sm:$0xf]
        %v464 = vld [vmem:[#allocation6 + $0x124] sm:$0xf]
        %v465 = vld [vmem:[#allocation6 + $0x128] sm:$0xf]
        %v466 = vld [vmem:[#allocation6 + $0x12c] sm:$0xf]
        %v467 = vld [vmem:[#allocation6 + $0x130] sm:$0xf]
        %v468 = vld [vmem:[#allocation6 + $0x134] sm:$0xf]
        %v469 = vld [vmem:[#allocation6 + $0x138] sm:$0xf]
        %v470 = vld [vmem:[#allocation6 + $0x13c] sm:$0xf]
        %v471 = vld [vmem:[#allocation6 + $0x140] sm:$0xf]
        %v472 = vld [vmem:[#allocation6 + $0x144] sm:$0xf]
        %v473 = vld [vmem:[#allocation6 + $0x148] sm:$0xf]
        %v474 = vld [vmem:[#allocation6 + $0x14c] sm:$0xf]
        %v475 = vld [vmem:[#allocation6 + $0x150] sm:$0xf]
        %v476 = vld [vmem:[#allocation6 + $0x154] sm:$0xf]
        %v477 = vld [vmem:[#allocation6 + $0x158] sm:$0xf]
        %v478 = vld [vmem:[#allocation6 + $0x15c] sm:$0xf]
        %v479 = vld [vmem:[#allocation6 + $0x160] sm:$0xf]
        %v480 = vld [vmem:[#allocation6 + $0x164] sm:$0xf]
        %v481 = vld [vmem:[#allocation6 + $0x168] sm:$0xf]
        %v482 = vld [vmem:[#allocation6 + $0x16c] sm:$0xf]
        %v483 = vld [vmem:[#allocation6 + $0x170] sm:$0xf]
        %v484 = vld [vmem:[#allocation6 + $0x174] sm:$0xf]
        %v485 = vld [vmem:[#allocation6 + $0x178] sm:$0xf]
        %v486 = vld [vmem:[#allocation6 + $0x17c] sm:$0xf]
        %v487 = vld [vmem:[#allocation6 + $0x180] sm:$0xf]
        %v488 = vld [vmem:[#allocation6 + $0x184] sm:$0xf]
        %v489 = vld [vmem:[#allocation6 + $0x188] sm:$0xf]
        %v490 = vld [vmem:[#allocation6 + $0x18c] sm:$0xf]
        %v491 = vld [vmem:[#allocation6 + $0x190] sm:$0xf]
        %v492 = vld [vmem:[#allocation6 + $0x194] sm:$0xf]
        %v493 = vld [vmem:[#allocation6 + $0x198] sm:$0xf]
        %v494 = vld [vmem:[#allocation6 + $0x19c] sm:$0xf]
        %v495 = vld [vmem:[#allocation6 + $0x1a0] sm:$0xf]
        %v496 = vld [vmem:[#allocation6 + $0x1a4] sm:$0xf]
        %v497 = vld [vmem:[#allocation6 + $0x1a8] sm:$0xf]
        %v498 = vld [vmem:[#allocation6 + $0x1ac] sm:$0xf]
        %v499 = vld [vmem:[#allocation6 + $0x1b0] sm:$0xf]
        %v500 = vld [vmem:[#allocation6 + $0x1b4] sm:$0xf]
        %v501 = vld [vmem:[#allocation6 + $0x1b8] sm:$0xf]
        %v502 = vld [vmem:[#allocation6 + $0x1bc] sm:$0xf]
        %v503 = vld [vmem:[%s2] sm:$0x1]
        %v505 = vlaneseq
        %v506 = vshrl.u32 %v505, 7
        %v507 = vsub.s32 0, %v506
        %v508 = vrot.slane %v503, %v507
        %v638 = vunpack.c.l.b16 %v263
        %v639 = vunpack.c.h.b16 %v263
        %v640 = vunpack.c.l.b16 %v264
        %v641 = vunpack.c.h.b16 %v264
        %v642 = vunpack.c.l.b16 %v265
        %v643 = vunpack.c.h.b16 %v265
        %v644 = vunpack.c.l.b16 %v266
        %v645 = vunpack.c.l.b16 %v267
        %v646 = vunpack.c.h.b16 %v267
        %v647 = vunpack.c.l.b16 %v268
        %v648 = vunpack.c.h.b16 %v268
        %v649 = vunpack.c.l.b16 %v269
        %v650 = vunpack.c.h.b16 %v269
        %v651 = vunpack.c.l.b16 %v270
        %v652 = vunpack.c.l.b16 %v271
        %v653 = vunpack.c.h.b16 %v271
        %v654 = vunpack.c.l.b16 %v272
        %v655 = vunpack.c.h.b16 %v272
        %v656 = vunpack.c.l.b16 %v273
        %v657 = vunpack.c.h.b16 %v273
        %v658 = vunpack.c.l.b16 %v274
        %v659 = vunpack.c.l.b16 %v275
        %v660 = vunpack.c.h.b16 %v275
        %v661 = vunpack.c.l.b16 %v276
        %v662 = vunpack.c.h.b16 %v276
        %v663 = vunpack.c.l.b16 %v277
        %v664 = vunpack.c.h.b16 %v277
        %v665 = vunpack.c.l.b16 %v278
        %v666 = vunpack.c.l.b16 %v279
        %v667 = vunpack.c.h.b16 %v279
        %v668 = vunpack.c.l.b16 %v280
        %v669 = vunpack.c.h.b16 %v280
        %v670 = vunpack.c.l.b16 %v281
        %v671 = vunpack.c.h.b16 %v281
        %v672 = vunpack.c.l.b16 %v282
        %v673 = vunpack.c.l.b16 %v283
        %v674 = vunpack.c.h.b16 %v283
        %v675 = vunpack.c.l.b16 %v284
        %v676 = vunpack.c.h.b16 %v284
        %v677 = vunpack.c.l.b16 %v285
        %v678 = vunpack.c.h.b16 %v285
        %v679 = vunpack.c.l.b16 %v286
        %v680 = vunpack.c.l.b16 %v287
        %v681 = vunpack.c.h.b16 %v287
        %v682 = vunpack.c.l.b16 %v288
        %v683 = vunpack.c.h.b16 %v288
        %v684 = vunpack.c.l.b16 %v289
        %v685 = vunpack.c.h.b16 %v289
        %v686 = vunpack.c.l.b16 %v290
        %v687 = vunpack.c.l.b16 %v291
        %v688 = vunpack.c.h.b16 %v291
        %v689 = vunpack.c.l.b16 %v292
        %v690 = vunpack.c.h.b16 %v292
        %v691 = vunpack.c.l.b16 %v293
        %v692 = vunpack.c.h.b16 %v293
        %v693 = vunpack.c.l.b16 %v294
        %v694 = vunpack.c.l.b16 %v295
        %v695 = vunpack.c.h.b16 %v295
        %v696 = vunpack.c.l.b16 %v296
        %v697 = vunpack.c.h.b16 %v296
        %v698 = vunpack.c.l.b16 %v297
        %v699 = vunpack.c.h.b16 %v297
        %v700 = vunpack.c.l.b16 %v298
        %v701 = vunpack.c.l.b16 %v299
        %v702 = vunpack.c.h.b16 %v299
        %v703 = vunpack.c.l.b16 %v300
        %v704 = vunpack.c.h.b16 %v300
        %v705 = vunpack.c.l.b16 %v301
        %v706 = vunpack.c.h.b16 %v301
        %v707 = vunpack.c.l.b16 %v302
        %v708 = vunpack.c.l.b16 %v303
        %v709 = vunpack.c.h.b16 %v303
        %v710 = vunpack.c.l.b16 %v304
        %v711 = vunpack.c.h.b16 %v304
        %v712 = vunpack.c.l.b16 %v305
        %v713 = vunpack.c.h.b16 %v305
        %v714 = vunpack.c.l.b16 %v306
        %v715 = vunpack.c.l.b16 %v307
        %v716 = vunpack.c.h.b16 %v307
        %v717 = vunpack.c.l.b16 %v308
        %v718 = vunpack.c.h.b16 %v308
        %v719 = vunpack.c.l.b16 %v309
        %v720 = vunpack.c.h.b16 %v309
        %v721 = vunpack.c.l.b16 %v310
        %v722 = vunpack.c.l.b16 %v311
        %v723 = vunpack.c.h.b16 %v311
        %v724 = vunpack.c.l.b16 %v312
        %v725 = vunpack.c.h.b16 %v312
        %v726 = vunpack.c.l.b16 %v313
        %v727 = vunpack.c.h.b16 %v313
        %v728 = vunpack.c.l.b16 %v314
        %v729 = vunpack.c.l.b16 %v315
        %v730 = vunpack.c.h.b16 %v315
        %v731 = vunpack.c.l.b16 %v316
        %v732 = vunpack.c.h.b16 %v316
        %v733 = vunpack.c.l.b16 %v317
        %v734 = vunpack.c.h.b16 %v317
        %v735 = vunpack.c.l.b16 %v318
        %v736 = vunpack.c.l.b16 %v319
        %v737 = vunpack.c.h.b16 %v319
        %v738 = vunpack.c.l.b16 %v320
        %v739 = vunpack.c.h.b16 %v320
        %v740 = vunpack.c.l.b16 %v321
        %v741 = vunpack.c.h.b16 %v321
        %v742 = vunpack.c.l.b16 %v322
        %v743 = vunpack.c.l.b16 %v323
        %v744 = vunpack.c.h.b16 %v323
        %v745 = vunpack.c.l.b16 %v324
        %v746 = vunpack.c.h.b16 %v324
        %v747 = vunpack.c.l.b16 %v325
        %v748 = vunpack.c.h.b16 %v325
        %v749 = vunpack.c.l.b16 %v326
        %v750 = vunpack.c.l.b16 %v327
        %v751 = vunpack.c.h.b16 %v327
        %v752 = vunpack.c.l.b16 %v328
        %v753 = vunpack.c.h.b16 %v328
        %v754 = vunpack.c.l.b16 %v329
        %v755 = vunpack.c.h.b16 %v329
        %v756 = vunpack.c.l.b16 %v330
        %v757 = vunpack.c.l.b16 %v331
        %v758 = vunpack.c.h.b16 %v331
        %v759 = vunpack.c.l.b16 %v332
        %v760 = vunpack.c.h.b16 %v332
        %v761 = vunpack.c.l.b16 %v333
        %v762 = vunpack.c.h.b16 %v333
        %v763 = vunpack.c.l.b16 %v334
        %v764 = vunpack.c.l.b16 %v335
        %v765 = vunpack.c.h.b16 %v335
        %v766 = vunpack.c.l.b16 %v336
        %v767 = vunpack.c.h.b16 %v336
        %v768 = vunpack.c.l.b16 %v337
        %v769 = vunpack.c.h.b16 %v337
        %v770 = vunpack.c.l.b16 %v338
        %v771 = vunpack.c.l.b16 %v339
        %v772 = vunpack.c.h.b16 %v339
        %v773 = vunpack.c.l.b16 %v340
        %v774 = vunpack.c.h.b16 %v340
        %v775 = vunpack.c.l.b16 %v341
        %v776 = vunpack.c.h.b16 %v341
        %v777 = vunpack.c.l.b16 %v342
        %v778 = vunpack.c.l.b16 %v343
        %v779 = vunpack.c.h.b16 %v343
        %v780 = vunpack.c.l.b16 %v344
        %v781 = vunpack.c.h.b16 %v344
        %v782 = vunpack.c.l.b16 %v345
        %v783 = vunpack.c.h.b16 %v345
        %v784 = vunpack.c.l.b16 %v346
        %v785 = vunpack.c.l.b16 %v347
        %v786 = vunpack.c.h.b16 %v347
        %v787 = vunpack.c.l.b16 %v348
        %v788 = vunpack.c.h.b16 %v348
        %v789 = vunpack.c.l.b16 %v349
        %v790 = vunpack.c.h.b16 %v349
        %v791 = vunpack.c.l.b16 %v350
        %v792 = vunpack.c.l.b16 %v351
        %v793 = vunpack.c.h.b16 %v351
        %v794 = vunpack.c.l.b16 %v352
        %v795 = vunpack.c.h.b16 %v352
        %v796 = vunpack.c.l.b16 %v353
        %v797 = vunpack.c.h.b16 %v353
        %v798 = vunpack.c.l.b16 %v354
        %v799 = vunpack.c.l.b16 %v355
        %v800 = vunpack.c.h.b16 %v355
        %v801 = vunpack.c.l.b16 %v356
        %v802 = vunpack.c.h.b16 %v356
        %v803 = vunpack.c.l.b16 %v357
        %v804 = vunpack.c.h.b16 %v357
        %v805 = vunpack.c.l.b16 %v358
        %v806 = vunpack.c.l.b16 %v359
        %v807 = vunpack.c.h.b16 %v359
        %v808 = vunpack.c.l.b16 %v360
        %v809 = vunpack.c.h.b16 %v360
        %v810 = vunpack.c.l.b16 %v361
        %v811 = vunpack.c.h.b16 %v361
        %v812 = vunpack.c.l.b16 %v362
        %v813 = vunpack.c.l.b16 %v363
        %v814 = vunpack.c.h.b16 %v363
        %v815 = vunpack.c.l.b16 %v364
        %v816 = vunpack.c.h.b16 %v364
        %v817 = vunpack.c.l.b16 %v365
        %v818 = vunpack.c.h.b16 %v365
        %v819 = vunpack.c.l.b16 %v366
        %v820 = vunpack.c.l.b16 %v367
        %v821 = vunpack.c.h.b16 %v367
        %v822 = vunpack.c.l.b16 %v368
        %v823 = vunpack.c.h.b16 %v368
        %v824 = vunpack.c.l.b16 %v369
        %v825 = vunpack.c.h.b16 %v369
        %v826 = vunpack.c.l.b16 %v370
        %v827 = vunpack.c.l.b16 %v371
        %v828 = vunpack.c.h.b16 %v371
        %v829 = vunpack.c.l.b16 %v372
        %v830 = vunpack.c.h.b16 %v372
        %v831 = vunpack.c.l.b16 %v373
        %v832 = vunpack.c.h.b16 %v373
        %v833 = vunpack.c.l.b16 %v374
        %v834 = vunpack.c.l.b16 %v375
        %v835 = vunpack.c.h.b16 %v375
        %v836 = vunpack.c.l.b16 %v376
        %v837 = vunpack.c.h.b16 %v376
        %v838 = vunpack.c.l.b16 %v377
        %v839 = vunpack.c.h.b16 %v377
        %v840 = vunpack.c.l.b16 %v378
        %v841 = vunpack.c.l.b16 %v379
        %v842 = vunpack.c.h.b16 %v379
        %v843 = vunpack.c.l.b16 %v380
        %v844 = vunpack.c.h.b16 %v380
        %v845 = vunpack.c.l.b16 %v381
        %v846 = vunpack.c.h.b16 %v381
        %v847 = vunpack.c.l.b16 %v382
        %v848 = vunpack.c.l.b16 %v383
        %v849 = vunpack.c.h.b16 %v383
        %v850 = vunpack.c.l.b16 %v384
        %v851 = vunpack.c.h.b16 %v384
        %v852 = vunpack.c.l.b16 %v385
        %v853 = vunpack.c.h.b16 %v385
        %v854 = vunpack.c.l.b16 %v386
        %v855 = vunpack.c.l.b16 %v387
        %v856 = vunpack.c.h.b16 %v387
        %v857 = vunpack.c.l.b16 %v388
        %v858 = vunpack.c.h.b16 %v388
        %v859 = vunpack.c.l.b16 %v389
        %v860 = vunpack.c.h.b16 %v389
        %v861 = vunpack.c.l.b16 %v390
        %v862 = vpack.c.b16 %v645, %v638
        %v863 = vpack.c.b16 %v646, %v639
        %v864 = vpack.c.b16 %v647, %v640
        %v865 = vpack.c.b16 %v648, %v641
        %v866 = vpack.c.b16 %v649, %v642
        %v867 = vpack.c.b16 %v650, %v643
        %v868 = vpack.c.b16 %v651, %v644
        %v869 = vpack.c.b16 %v659, %v652
        %v870 = vpack.c.b16 %v660, %v653
        %v871 = vpack.c.b16 %v661, %v654
        %v872 = vpack.c.b16 %v662, %v655
        %v873 = vpack.c.b16 %v663, %v656
        %v874 = vpack.c.b16 %v664, %v657
        %v875 = vpack.c.b16 %v665, %v658
        %v876 = vpack.c.b16 %v673, %v666
        %v877 = vpack.c.b16 %v674, %v667
        %v878 = vpack.c.b16 %v675, %v668
        %v879 = vpack.c.b16 %v676, %v669
        %v880 = vpack.c.b16 %v677, %v670
        %v881 = vpack.c.b16 %v678, %v671
        %v882 = vpack.c.b16 %v679, %v672
        %v883 = vpack.c.b16 %v687, %v680
        %v884 = vpack.c.b16 %v688, %v681
        %v885 = vpack.c.b16 %v689, %v682
        %v886 = vpack.c.b16 %v690, %v683
        %v887 = vpack.c.b16 %v691, %v684
        %v888 = vpack.c.b16 %v692, %v685
        %v889 = vpack.c.b16 %v693, %v686
        %v890 = vpack.c.b16 %v701, %v694
        %v891 = vpack.c.b16 %v702, %v695
        %v892 = vpack.c.b16 %v703, %v696
        %v893 = vpack.c.b16 %v704, %v697
        %v894 = vpack.c.b16 %v705, %v698
        %v895 = vpack.c.b16 %v706, %v699
        %v896 = vpack.c.b16 %v707, %v700
        %v897 = vpack.c.b16 %v715, %v708
        %v898 = vpack.c.b16 %v716, %v709
        %v899 = vpack.c.b16 %v717, %v710
        %v900 = vpack.c.b16 %v718, %v711
        %v901 = vpack.c.b16 %v719, %v712
        %v902 = vpack.c.b16 %v720, %v713
        %v903 = vpack.c.b16 %v721, %v714
        %v904 = vpack.c.b16 %v729, %v722
        %v905 = vpack.c.b16 %v730, %v723
        %v906 = vpack.c.b16 %v731, %v724
        %v907 = vpack.c.b16 %v732, %v725
        %v908 = vpack.c.b16 %v733, %v726
        %v909 = vpack.c.b16 %v734, %v727
        %v910 = vpack.c.b16 %v735, %v728
        %v911 = vpack.c.b16 %v743, %v736
        %v912 = vpack.c.b16 %v744, %v737
        %v913 = vpack.c.b16 %v745, %v738
        %v914 = vpack.c.b16 %v746, %v739
        %v915 = vpack.c.b16 %v747, %v740
        %v916 = vpack.c.b16 %v748, %v741
        %v917 = vpack.c.b16 %v749, %v742
        %v918 = vpack.c.b16 %v757, %v750
        %v919 = vpack.c.b16 %v758, %v751
        %v920 = vpack.c.b16 %v759, %v752
        %v921 = vpack.c.b16 %v760, %v753
        %v922 = vpack.c.b16 %v761, %v754
        %v923 = vpack.c.b16 %v762, %v755
        %v924 = vpack.c.b16 %v763, %v756
        %v925 = vpack.c.b16 %v771, %v764
        %v926 = vpack.c.b16 %v772, %v765
        %v927 = vpack.c.b16 %v773, %v766
        %v928 = vpack.c.b16 %v774, %v767
        %v929 = vpack.c.b16 %v775, %v768
        %v930 = vpack.c.b16 %v776, %v769
        %v931 = vpack.c.b16 %v777, %v770
        %v932 = vpack.c.b16 %v785, %v778
        %v933 = vpack.c.b16 %v786, %v779
        %v934 = vpack.c.b16 %v787, %v780
        %v935 = vpack.c.b16 %v788, %v781
        %v936 = vpack.c.b16 %v789, %v782
        %v937 = vpack.c.b16 %v790, %v783
        %v938 = vpack.c.b16 %v791, %v784
        %v939 = vpack.c.b16 %v799, %v792
        %v940 = vpack.c.b16 %v800, %v793
        %v941 = vpack.c.b16 %v801, %v794
        %v942 = vpack.c.b16 %v802, %v795
        %v943 = vpack.c.b16 %v803, %v796
        %v944 = vpack.c.b16 %v804, %v797
        %v945 = vpack.c.b16 %v805, %v798
        %v946 = vpack.c.b16 %v813, %v806
        %v947 = vpack.c.b16 %v814, %v807
        %v948 = vpack.c.b16 %v815, %v808
        %v949 = vpack.c.b16 %v816, %v809
        %v950 = vpack.c.b16 %v817, %v810
        %v951 = vpack.c.b16 %v818, %v811
        %v952 = vpack.c.b16 %v819, %v812
        %v953 = vpack.c.b16 %v827, %v820
        %v954 = vpack.c.b16 %v828, %v821
        %v955 = vpack.c.b16 %v829, %v822
        %v956 = vpack.c.b16 %v830, %v823
        %v957 = vpack.c.b16 %v831, %v824
        %v958 = vpack.c.b16 %v832, %v825
        %v959 = vpack.c.b16 %v833, %v826
        %v960 = vpack.c.b16 %v841, %v834
        %v961 = vpack.c.b16 %v842, %v835
        %v962 = vpack.c.b16 %v843, %v836
        %v963 = vpack.c.b16 %v844, %v837
        %v964 = vpack.c.b16 %v845, %v838
        %v965 = vpack.c.b16 %v846, %v839
        %v966 = vpack.c.b16 %v847, %v840
        %v967 = vpack.c.b16 %v855, %v848
        %v968 = vpack.c.b16 %v856, %v849
        %v969 = vpack.c.b16 %v857, %v850
        %v970 = vpack.c.b16 %v858, %v851
        %v971 = vpack.c.b16 %v859, %v852
        %v972 = vpack.c.b16 %v860, %v853
        %v973 = vpack.c.b16 %v861, %v854
        %v1198 = vunpack.c.l.b16 %v391
        %v1199 = vunpack.c.l.b16 %v392
        %v1200 = vunpack.c.l.b16 %v393
        %v1201 = vunpack.c.l.b16 %v394
        %v1202 = vunpack.c.l.b16 %v395
        %v1203 = vunpack.c.l.b16 %v396
        %v1204 = vunpack.c.l.b16 %v397
        %v1205 = vunpack.c.l.b16 %v398
        %v1206 = vunpack.c.l.b16 %v399
        %v1207 = vunpack.c.l.b16 %v400
        %v1208 = vunpack.c.l.b16 %v401
        %v1209 = vunpack.c.l.b16 %v402
        %v1210 = vunpack.c.l.b16 %v403
        %v1211 = vunpack.c.l.b16 %v404
        %v1212 = vunpack.c.l.b16 %v405
        %v1213 = vunpack.c.l.b16 %v406
        %v1214 = vunpack.c.l.b16 %v407
        %v1215 = vunpack.c.l.b16 %v408
        %v1216 = vunpack.c.l.b16 %v409
        %v1217 = vunpack.c.l.b16 %v410
        %v1218 = vunpack.c.l.b16 %v411
        %v1219 = vunpack.c.l.b16 %v412
        %v1220 = vunpack.c.l.b16 %v413
        %v1221 = vunpack.c.l.b16 %v414
        %v1222 = vunpack.c.l.b16 %v415
        %v1223 = vunpack.c.l.b16 %v416
        %v1224 = vunpack.c.l.b16 %v417
        %v1225 = vunpack.c.l.b16 %v418
        %v1226 = vunpack.c.l.b16 %v419
        %v1227 = vunpack.c.l.b16 %v420
        %v1228 = vunpack.c.l.b16 %v421
        %v1229 = vunpack.c.l.b16 %v422
        %v1230 = vunpack.c.l.b16 %v423
        %v1231 = vunpack.c.l.b16 %v424
        %v1232 = vunpack.c.l.b16 %v425
        %v1233 = vunpack.c.l.b16 %v426
        %v1234 = vunpack.c.l.b16 %v427
        %v1235 = vunpack.c.l.b16 %v428
        %v1236 = vunpack.c.l.b16 %v429
        %v1237 = vunpack.c.l.b16 %v430
        %v1238 = vunpack.c.l.b16 %v431
        %v1239 = vunpack.c.l.b16 %v432
        %v1240 = vunpack.c.l.b16 %v433
        %v1241 = vunpack.c.l.b16 %v434
        %v1242 = vunpack.c.l.b16 %v435
        %v1243 = vunpack.c.l.b16 %v436
        %v1244 = vunpack.c.l.b16 %v437
        %v1245 = vunpack.c.l.b16 %v438
        %v1246 = vunpack.c.l.b16 %v439
        %v1247 = vunpack.c.l.b16 %v440
        %v1248 = vunpack.c.l.b16 %v441
        %v1249 = vunpack.c.l.b16 %v442
        %v1250 = vunpack.c.l.b16 %v443
        %v1251 = vunpack.c.l.b16 %v444
        %v1252 = vunpack.c.l.b16 %v445
        %v1253 = vunpack.c.l.b16 %v446
        %v1254 = vunpack.c.l.b16 %v447
        %v1255 = vunpack.c.l.b16 %v448
        %v1256 = vunpack.c.l.b16 %v449
        %v1257 = vunpack.c.l.b16 %v450
        %v1258 = vunpack.c.l.b16 %v451
        %v1259 = vunpack.c.l.b16 %v452
        %v1260 = vunpack.c.l.b16 %v453
        %v1261 = vunpack.c.l.b16 %v454
        %v1262 = vunpack.c.l.b16 %v455
        %v1263 = vunpack.c.l.b16 %v456
        %v1264 = vunpack.c.l.b16 %v457
        %v1265 = vunpack.c.l.b16 %v458
        %v1266 = vunpack.c.l.b16 %v459
        %v1267 = vunpack.c.l.b16 %v460
        %v1268 = vunpack.c.l.b16 %v461
        %v1269 = vunpack.c.l.b16 %v462
        %v1270 = vunpack.c.l.b16 %v463
        %v1271 = vunpack.c.l.b16 %v464
        %v1272 = vunpack.c.l.b16 %v465
        %v1273 = vunpack.c.l.b16 %v466
        %v1274 = vunpack.c.l.b16 %v467
        %v1275 = vunpack.c.l.b16 %v468
        %v1276 = vunpack.c.l.b16 %v469
        %v1277 = vunpack.c.l.b16 %v470
        %v1278 = vunpack.c.l.b16 %v471
        %v1279 = vunpack.c.l.b16 %v472
        %v1280 = vunpack.c.l.b16 %v473
        %v1281 = vunpack.c.l.b16 %v474
        %v1282 = vunpack.c.l.b16 %v475
        %v1283 = vunpack.c.l.b16 %v476
        %v1284 = vunpack.c.l.b16 %v477
        %v1285 = vunpack.c.l.b16 %v478
        %v1286 = vunpack.c.l.b16 %v479
        %v1287 = vunpack.c.l.b16 %v480
        %v1288 = vunpack.c.l.b16 %v481
        %v1289 = vunpack.c.l.b16 %v482
        %v1290 = vunpack.c.l.b16 %v483
        %v1291 = vunpack.c.l.b16 %v484
        %v1292 = vunpack.c.l.b16 %v485
        %v1293 = vunpack.c.l.b16 %v486
        %v1294 = vunpack.c.l.b16 %v487
        %v1295 = vunpack.c.l.b16 %v488
        %v1296 = vunpack.c.l.b16 %v489
        %v1297 = vunpack.c.l.b16 %v490
        %v1298 = vunpack.c.l.b16 %v491
        %v1299 = vunpack.c.l.b16 %v492
        %v1300 = vunpack.c.l.b16 %v493
        %v1301 = vunpack.c.l.b16 %v494
        %v1302 = vunpack.c.l.b16 %v495
        %v1303 = vunpack.c.l.b16 %v496
        %v1304 = vunpack.c.l.b16 %v497
        %v1305 = vunpack.c.l.b16 %v498
        %v1306 = vunpack.c.l.b16 %v499
        %v1307 = vunpack.c.l.b16 %v500
        %v1308 = vunpack.c.l.b16 %v501
        %v1309 = vunpack.c.l.b16 %v502
        %v1310 = vpack.c.b16 %v1199, %v1198
        %v1311 = vpack.c.b16 %v1201, %v1200
        %v1312 = vpack.c.b16 %v1203, %v1202
        %v1313 = vpack.c.b16 %v1205, %v1204
        %v1314 = vpack.c.b16 %v1207, %v1206
        %v1315 = vpack.c.b16 %v1209, %v1208
        %v1316 = vpack.c.b16 %v1211, %v1210
        %v1317 = vpack.c.b16 %v1213, %v1212
        %v1318 = vpack.c.b16 %v1215, %v1214
        %v1319 = vpack.c.b16 %v1217, %v1216
        %v1320 = vpack.c.b16 %v1219, %v1218
        %v1321 = vpack.c.b16 %v1221, %v1220
        %v1322 = vpack.c.b16 %v1223, %v1222
        %v1323 = vpack.c.b16 %v1225, %v1224
        %v1324 = vpack.c.b16 %v1227, %v1226
        %v1325 = vpack.c.b16 %v1229, %v1228
        %v1326 = vpack.c.b16 %v1231, %v1230
        %v1327 = vpack.c.b16 %v1233, %v1232
        %v1328 = vpack.c.b16 %v1235, %v1234
        %v1329 = vpack.c.b16 %v1237, %v1236
        %v1330 = vpack.c.b16 %v1239, %v1238
        %v1331 = vpack.c.b16 %v1241, %v1240
        %v1332 = vpack.c.b16 %v1243, %v1242
        %v1333 = vpack.c.b16 %v1245, %v1244
        %v1334 = vpack.c.b16 %v1247, %v1246
        %v1335 = vpack.c.b16 %v1249, %v1248
        %v1336 = vpack.c.b16 %v1251, %v1250
        %v1337 = vpack.c.b16 %v1253, %v1252
        %v1338 = vpack.c.b16 %v1255, %v1254
        %v1339 = vpack.c.b16 %v1257, %v1256
        %v1340 = vpack.c.b16 %v1259, %v1258
        %v1341 = vpack.c.b16 %v1261, %v1260
        %v1342 = vpack.c.b16 %v1263, %v1262
        %v1343 = vpack.c.b16 %v1265, %v1264
        %v1344 = vpack.c.b16 %v1267, %v1266
        %v1345 = vpack.c.b16 %v1269, %v1268
        %v1346 = vpack.c.b16 %v1271, %v1270
        %v1347 = vpack.c.b16 %v1273, %v1272
        %v1348 = vpack.c.b16 %v1275, %v1274
        %v1349 = vpack.c.b16 %v1277, %v1276
        %v1350 = vpack.c.b16 %v1279, %v1278
        %v1351 = vpack.c.b16 %v1281, %v1280
        %v1352 = vpack.c.b16 %v1283, %v1282
        %v1353 = vpack.c.b16 %v1285, %v1284
        %v1354 = vpack.c.b16 %v1287, %v1286
        %v1355 = vpack.c.b16 %v1289, %v1288
        %v1356 = vpack.c.b16 %v1291, %v1290
        %v1357 = vpack.c.b16 %v1293, %v1292
        %v1358 = vpack.c.b16 %v1295, %v1294
        %v1359 = vpack.c.b16 %v1297, %v1296
        %v1360 = vpack.c.b16 %v1299, %v1298
        %v1361 = vpack.c.b16 %v1301, %v1300
        %v1362 = vpack.c.b16 %v1303, %v1302
        %v1363 = vpack.c.b16 %v1305, %v1304
        %v1364 = vpack.c.b16 %v1307, %v1306
        %v1365 = vpack.c.b16 %v1309, %v1308
        %1422 = vmatprep.subr.bf16.mxu0 0
        %1423 = vmatpush1.bf16.msra.mxu0 %v1317
        %1424 = vmatprep.subr.bf16.mxu0 0
        %1425 = vmatpush1.bf16.msra.mxu0 %v1316
        %1426 = vmatprep.subr.bf16.mxu0 0
        %1427 = vmatpush1.bf16.msra.mxu0 %v1315
        %1428 = vmatprep.subr.bf16.mxu0 0
        %1429 = vmatpush1.bf16.msra.mxu0 %v1314
        %1430 = vmatprep.subr.bf16.mxu0 0
        %1431 = vmatpush1.bf16.msra.mxu0 %v1313
        %1432 = vmatprep.subr.bf16.mxu0 0
        %1433 = vmatpush1.bf16.msra.mxu0 %v1312
        %1434 = vmatprep.subr.bf16.mxu0 0
        %1435 = vmatpush1.bf16.msra.mxu0 %v1311
        %1436 = vmatprep.subr.bf16.mxu0 0
        %1437 = vmatpush1.bf16.msra.mxu0 %v1310
        %1438 = vmatprep.subr.bf16.mxu0 0
        %1439 = vmatpush2.bf16.msra.mxu0 %v1325
        %1440 = vmatprep.subr.bf16.mxu0 0
        %1441 = vmatpush2.bf16.msra.mxu0 %v1324
        %1442 = vmatprep.subr.bf16.mxu0 0
        %1443 = vmatpush2.bf16.msra.mxu0 %v1323
        %1444 = vmatprep.subr.bf16.mxu0 0
        %1445 = vmatpush2.bf16.msra.mxu0 %v1322
        %1446 = vmatprep.subr.bf16.mxu0 0
        %1447 = vmatpush2.bf16.msra.mxu0 %v1321
        %1448 = vmatprep.subr.bf16.mxu0 0
        %1449 = vmatpush2.bf16.msra.mxu0 %v1320
        %1450 = vmatprep.subr.bf16.mxu0 0
        %1451 = vmatpush2.bf16.msra.mxu0 %v1319
        %1452 = vmatprep.subr.bf16.mxu0 0
        %1453 = vmatpush2.bf16.msra.mxu0 %v1318
        %1454 = vmatprep.mubr.bf16.mxu0 %v863
        %1455 = vmatmul.mubr.bf16.gmra.mxu0 %v862
        %v1456 = vpop.f32.mrf.mxu0
        %v1457 = vadd.f32 %v508, %v1456
        %v1458 = vpop.f32.mrf.mxu0
        %v1459 = vpop.f32.mrf.mxu0
        %v1460 = vadd.f32 %v508, %v1459
        %v1461 = vpop.f32.mrf.mxu0
        %1462 = vmatprep.mubr.bf16.mxu0 %v870
        %1463 = vmatmul.mubr.bf16.gmra.mxu0 %v869
        %v1464 = vpop.f32.mrf.mxu0
        %v1465 = vadd.f32 %v508, %v1464
        %v1466 = vpop.f32.mrf.mxu0
        %v1467 = vpop.f32.mrf.mxu0
        %v1468 = vadd.f32 %v508, %v1467
        %v1469 = vpop.f32.mrf.mxu0
        %1470 = vmatprep.mubr.bf16.mxu0 %v877
        %1471 = vmatmul.mubr.bf16.gmra.mxu0 %v876
        %v1472 = vpop.f32.mrf.mxu0
        %v1473 = vadd.f32 %v508, %v1472
        %v1474 = vpop.f32.mrf.mxu0
        %v1475 = vpop.f32.mrf.mxu0
        %v1476 = vadd.f32 %v508, %v1475
        %v1477 = vpop.f32.mrf.mxu0
        %1478 = vmatprep.mubr.bf16.mxu0 %v884
        %1479 = vmatmul.mubr.bf16.gmra.mxu0 %v883
        %v1480 = vpop.f32.mrf.mxu0
        %v1481 = vadd.f32 %v508, %v1480
        %v1482 = vpop.f32.mrf.mxu0
        %v1483 = vpop.f32.mrf.mxu0
        %v1484 = vadd.f32 %v508, %v1483
        %v1485 = vpop.f32.mrf.mxu0
        %1486 = vmatprep.mubr.bf16.mxu0 %v891
        %1487 = vmatmul.mubr.bf16.gmra.mxu0 %v890
        %v1488 = vpop.f32.mrf.mxu0
        %v1489 = vadd.f32 %v508, %v1488
        %v1490 = vpop.f32.mrf.mxu0
        %v1491 = vpop.f32.mrf.mxu0
        %v1492 = vadd.f32 %v508, %v1491
        %v1493 = vpop.f32.mrf.mxu0
        %1494 = vmatprep.mubr.bf16.mxu0 %v898
        %1495 = vmatmul.mubr.bf16.gmra.mxu0 %v897
        %v1496 = vpop.f32.mrf.mxu0
        %v1497 = vadd.f32 %v508, %v1496
        %v1498 = vpop.f32.mrf.mxu0
        %v1499 = vpop.f32.mrf.mxu0
        %v1500 = vadd.f32 %v508, %v1499
        %v1501 = vpop.f32.mrf.mxu0
        %1502 = vmatprep.mubr.bf16.mxu0 %v905
        %1503 = vmatmul.mubr.bf16.gmra.mxu0 %v904
        %v1504 = vpop.f32.mrf.mxu0
        %v1505 = vadd.f32 %v508, %v1504
        %v1506 = vpop.f32.mrf.mxu0
        %v1507 = vpop.f32.mrf.mxu0
        %v1508 = vadd.f32 %v508, %v1507
        %v1509 = vpop.f32.mrf.mxu0
        %1510 = vmatprep.mubr.bf16.mxu0 %v912
        %1511 = vmatmul.mubr.bf16.gmra.mxu0 %v911
        %v1512 = vpop.f32.mrf.mxu0
        %v1513 = vadd.f32 %v508, %v1512
        %v1514 = vpop.f32.mrf.mxu0
        %v1515 = vpop.f32.mrf.mxu0
        %v1516 = vadd.f32 %v508, %v1515
        %v1517 = vpop.f32.mrf.mxu0
        %1518 = vmatprep.mubr.bf16.mxu0 %v919
        %1519 = vmatmul.mubr.bf16.gmra.mxu0 %v918
        %v1520 = vpop.f32.mrf.mxu0
        %v1521 = vadd.f32 %v508, %v1520
        %v1522 = vpop.f32.mrf.mxu0
        %v1523 = vpop.f32.mrf.mxu0
        %v1524 = vadd.f32 %v508, %v1523
        %v1525 = vpop.f32.mrf.mxu0
        %1526 = vmatprep.mubr.bf16.mxu0 %v926
        %1527 = vmatmul.mubr.bf16.gmra.mxu0 %v925
        %v1528 = vpop.f32.mrf.mxu0
        %v1529 = vadd.f32 %v508, %v1528
        %v1530 = vpop.f32.mrf.mxu0
        %v1531 = vpop.f32.mrf.mxu0
        %v1532 = vadd.f32 %v508, %v1531
        %v1533 = vpop.f32.mrf.mxu0
        %1534 = vmatprep.mubr.bf16.mxu0 %v933
        %1535 = vmatmul.mubr.bf16.gmra.mxu0 %v932
        %v1536 = vpop.f32.mrf.mxu0
        %v1537 = vadd.f32 %v508, %v1536
        %v1538 = vpop.f32.mrf.mxu0
        %v1539 = vpop.f32.mrf.mxu0
        %v1540 = vadd.f32 %v508, %v1539
        %v1541 = vpop.f32.mrf.mxu0
        %1542 = vmatprep.mubr.bf16.mxu0 %v940
        %1543 = vmatmul.mubr.bf16.gmra.mxu0 %v939
        %v1544 = vpop.f32.mrf.mxu0
        %v1545 = vadd.f32 %v508, %v1544
        %v1546 = vpop.f32.mrf.mxu0
        %v1547 = vpop.f32.mrf.mxu0
        %v1548 = vadd.f32 %v508, %v1547
        %v1549 = vpop.f32.mrf.mxu0
        %1550 = vmatprep.mubr.bf16.mxu0 %v947
        %1551 = vmatmul.mubr.bf16.gmra.mxu0 %v946
        %v1552 = vpop.f32.mrf.mxu0
        %v1553 = vadd.f32 %v508, %v1552
        %v1554 = vpop.f32.mrf.mxu0
        %v1555 = vpop.f32.mrf.mxu0
        %v1556 = vadd.f32 %v508, %v1555
        %v1557 = vpop.f32.mrf.mxu0
        %1558 = vmatprep.mubr.bf16.mxu0 %v954
        %1559 = vmatmul.mubr.bf16.gmra.mxu0 %v953
        %v1560 = vpop.f32.mrf.mxu0
        %v1561 = vadd.f32 %v508, %v1560
        %v1562 = vpop.f32.mrf.mxu0
        %v1563 = vpop.f32.mrf.mxu0
        %v1564 = vadd.f32 %v508, %v1563
        %v1565 = vpop.f32.mrf.mxu0
        %1566 = vmatprep.mubr.bf16.mxu0 %v961
        %1567 = vmatmul.mubr.bf16.gmra.mxu0 %v960
        %v1568 = vpop.f32.mrf.mxu0
        %v1569 = vadd.f32 %v508, %v1568
        %v1570 = vpop.f32.mrf.mxu0
        %v1571 = vpop.f32.mrf.mxu0
        %v1572 = vadd.f32 %v508, %v1571
        %v1573 = vpop.f32.mrf.mxu0
        %1574 = vmatprep.mubr.bf16.mxu0 %v968
        %1575 = vmatmul.mubr.bf16.gmra.mxu0 %v967
        %v1576 = vpop.f32.mrf.mxu0
        %v1577 = vadd.f32 %v508, %v1576
        %v1578 = vpop.f32.mrf.mxu0
        %v1579 = vpop.f32.mrf.mxu0
        %v1580 = vadd.f32 %v508, %v1579
        %v1581 = vpop.f32.mrf.mxu0
        %1582 = vdwg.mxu0
        %1583 = vmatprep.subr.bf16.mxu0 0
        %1584 = vmatpush1.bf16.msra.mxu0 %v1333
        %1585 = vmatprep.subr.bf16.mxu0 0
        %1586 = vmatpush1.bf16.msra.mxu0 %v1332
        %1587 = vmatprep.subr.bf16.mxu0 0
        %1588 = vmatpush1.bf16.msra.mxu0 %v1331
        %1589 = vmatprep.subr.bf16.mxu0 0
        %1590 = vmatpush1.bf16.msra.mxu0 %v1330
        %1591 = vmatprep.subr.bf16.mxu0 0
        %1592 = vmatpush1.bf16.msra.mxu0 %v1329
        %1593 = vmatprep.subr.bf16.mxu0 0
        %1594 = vmatpush1.bf16.msra.mxu0 %v1328
        %1595 = vmatprep.subr.bf16.mxu0 0
        %1596 = vmatpush1.bf16.msra.mxu0 %v1327
        %1597 = vmatprep.subr.bf16.mxu0 0
        %1598 = vmatpush1.bf16.msra.mxu0 %v1326
        %1599 = vmatprep.subr.bf16.mxu0 0
        %1600 = vmatpush2.bf16.msra.mxu0 %v1341
        %1601 = vmatprep.subr.bf16.mxu0 0
        %1602 = vmatpush2.bf16.msra.mxu0 %v1340
        %1603 = vmatprep.subr.bf16.mxu0 0
        %1604 = vmatpush2.bf16.msra.mxu0 %v1339
        %1605 = vmatprep.subr.bf16.mxu0 0
        %1606 = vmatpush2.bf16.msra.mxu0 %v1338
        %1607 = vmatprep.subr.bf16.mxu0 0
        %1608 = vmatpush2.bf16.msra.mxu0 %v1337
        %1609 = vmatprep.subr.bf16.mxu0 0
        %1610 = vmatpush2.bf16.msra.mxu0 %v1336
        %1611 = vmatprep.subr.bf16.mxu0 0
        %1612 = vmatpush2.bf16.msra.mxu0 %v1335
        %1613 = vmatprep.subr.bf16.mxu0 0
        %1614 = vmatpush2.bf16.msra.mxu0 %v1334
        %1615 = vmatprep.mubr.bf16.mxu0 %v865
        %1616 = vmatmul.mubr.bf16.gmra.mxu0 %v864
        %v1617 = vpop.f32.mrf.mxu0
        %v1618 = vadd.f32 %v1457, %v1617
        %v1619 = vpop.f32.mrf.mxu0
        %v1620 = vpop.f32.mrf.mxu0
        %v1621 = vadd.f32 %v1460, %v1620
        %v1622 = vpop.f32.mrf.mxu0
        %1623 = vmatprep.mubr.bf16.mxu0 %v872
        %1624 = vmatmul.mubr.bf16.gmra.mxu0 %v871
        %v1625 = vpop.f32.mrf.mxu0
        %v1626 = vadd.f32 %v1465, %v1625
        %v1627 = vpop.f32.mrf.mxu0
        %v1628 = vpop.f32.mrf.mxu0
        %v1629 = vadd.f32 %v1468, %v1628
        %v1630 = vpop.f32.mrf.mxu0
        %1631 = vmatprep.mubr.bf16.mxu0 %v879
        %1632 = vmatmul.mubr.bf16.gmra.mxu0 %v878
        %v1633 = vpop.f32.mrf.mxu0
        %v1634 = vadd.f32 %v1473, %v1633
        %v1635 = vpop.f32.mrf.mxu0
        %v1636 = vpop.f32.mrf.mxu0
        %v1637 = vadd.f32 %v1476, %v1636
        %v1638 = vpop.f32.mrf.mxu0
        %1639 = vmatprep.mubr.bf16.mxu0 %v886
        %1640 = vmatmul.mubr.bf16.gmra.mxu0 %v885
        %v1641 = vpop.f32.mrf.mxu0
        %v1642 = vadd.f32 %v1481, %v1641
        %v1643 = vpop.f32.mrf.mxu0
        %v1644 = vpop.f32.mrf.mxu0
        %v1645 = vadd.f32 %v1484, %v1644
        %v1646 = vpop.f32.mrf.mxu0
        %1647 = vmatprep.mubr.bf16.mxu0 %v893
        %1648 = vmatmul.mubr.bf16.gmra.mxu0 %v892
        %v1649 = vpop.f32.mrf.mxu0
        %v1650 = vadd.f32 %v1489, %v1649
        %v1651 = vpop.f32.mrf.mxu0
        %v1652 = vpop.f32.mrf.mxu0
        %v1653 = vadd.f32 %v1492, %v1652
        %v1654 = vpop.f32.mrf.mxu0
        %1655 = vmatprep.mubr.bf16.mxu0 %v900
        %1656 = vmatmul.mubr.bf16.gmra.mxu0 %v899
        %v1657 = vpop.f32.mrf.mxu0
        %v1658 = vadd.f32 %v1497, %v1657
        %v1659 = vpop.f32.mrf.mxu0
        %v1660 = vpop.f32.mrf.mxu0
        %v1661 = vadd.f32 %v1500, %v1660
        %v1662 = vpop.f32.mrf.mxu0
        %1663 = vmatprep.mubr.bf16.mxu0 %v907
        %1664 = vmatmul.mubr.bf16.gmra.mxu0 %v906
        %v1665 = vpop.f32.mrf.mxu0
        %v1666 = vadd.f32 %v1505, %v1665
        %v1667 = vpop.f32.mrf.mxu0
        %v1668 = vpop.f32.mrf.mxu0
        %v1669 = vadd.f32 %v1508, %v1668
        %v1670 = vpop.f32.mrf.mxu0
        %1671 = vmatprep.mubr.bf16.mxu0 %v914
        %1672 = vmatmul.mubr.bf16.gmra.mxu0 %v913
        %v1673 = vpop.f32.mrf.mxu0
        %v1674 = vadd.f32 %v1513, %v1673
        %v1675 = vpop.f32.mrf.mxu0
        %v1676 = vpop.f32.mrf.mxu0
        %v1677 = vadd.f32 %v1516, %v1676
        %v1678 = vpop.f32.mrf.mxu0
        %1679 = vmatprep.mubr.bf16.mxu0 %v921
        %1680 = vmatmul.mubr.bf16.gmra.mxu0 %v920
        %v1681 = vpop.f32.mrf.mxu0
        %v1682 = vadd.f32 %v1521, %v1681
        %v1683 = vpop.f32.mrf.mxu0
        %v1684 = vpop.f32.mrf.mxu0
        %v1685 = vadd.f32 %v1524, %v1684
        %v1686 = vpop.f32.mrf.mxu0
        %1687 = vmatprep.mubr.bf16.mxu0 %v928
        %1688 = vmatmul.mubr.bf16.gmra.mxu0 %v927
        %v1689 = vpop.f32.mrf.mxu0
        %v1690 = vadd.f32 %v1529, %v1689
        %v1691 = vpop.f32.mrf.mxu0
        %v1692 = vpop.f32.mrf.mxu0
        %v1693 = vadd.f32 %v1532, %v1692
        %v1694 = vpop.f32.mrf.mxu0
        %1695 = vmatprep.mubr.bf16.mxu0 %v935
        %1696 = vmatmul.mubr.bf16.gmra.mxu0 %v934
        %v1697 = vpop.f32.mrf.mxu0
        %v1698 = vadd.f32 %v1537, %v1697
        %v1699 = vpop.f32.mrf.mxu0
        %v1700 = vpop.f32.mrf.mxu0
        %v1701 = vadd.f32 %v1540, %v1700
        %v1702 = vpop.f32.mrf.mxu0
        %1703 = vmatprep.mubr.bf16.mxu0 %v942
        %1704 = vmatmul.mubr.bf16.gmra.mxu0 %v941
        %v1705 = vpop.f32.mrf.mxu0
        %v1706 = vadd.f32 %v1545, %v1705
        %v1707 = vpop.f32.mrf.mxu0
        %v1708 = vpop.f32.mrf.mxu0
        %v1709 = vadd.f32 %v1548, %v1708
        %v1710 = vpop.f32.mrf.mxu0
        %1711 = vmatprep.mubr.bf16.mxu0 %v949
        %1712 = vmatmul.mubr.bf16.gmra.mxu0 %v948
        %v1713 = vpop.f32.mrf.mxu0
        %v1714 = vadd.f32 %v1553, %v1713
        %v1715 = vpop.f32.mrf.mxu0
        %v1716 = vpop.f32.mrf.mxu0
        %v1717 = vadd.f32 %v1556, %v1716
        %v1718 = vpop.f32.mrf.mxu0
        %1719 = vmatprep.mubr.bf16.mxu0 %v956
        %1720 = vmatmul.mubr.bf16.gmra.mxu0 %v955
        %v1721 = vpop.f32.mrf.mxu0
        %v1722 = vadd.f32 %v1561, %v1721
        %v1723 = vpop.f32.mrf.mxu0
        %v1724 = vpop.f32.mrf.mxu0
        %v1725 = vadd.f32 %v1564, %v1724
        %v1726 = vpop.f32.mrf.mxu0
        %1727 = vmatprep.mubr.bf16.mxu0 %v963
        %1728 = vmatmul.mubr.bf16.gmra.mxu0 %v962
        %v1729 = vpop.f32.mrf.mxu0
        %v1730 = vadd.f32 %v1569, %v1729
        %v1731 = vpop.f32.mrf.mxu0
        %v1732 = vpop.f32.mrf.mxu0
        %v1733 = vadd.f32 %v1572, %v1732
        %v1734 = vpop.f32.mrf.mxu0
        %1735 = vmatprep.mubr.bf16.mxu0 %v970
        %1736 = vmatmul.mubr.bf16.gmra.mxu0 %v969
        %v1737 = vpop.f32.mrf.mxu0
        %v1738 = vadd.f32 %v1577, %v1737
        %v1739 = vpop.f32.mrf.mxu0
        %v1740 = vpop.f32.mrf.mxu0
        %v1741 = vadd.f32 %v1580, %v1740
        %v1742 = vpop.f32.mrf.mxu0
        %1743 = vdwg.mxu0
        %1744 = vmatprep.subr.bf16.mxu0 0
        %1745 = vmatpush1.bf16.msra.mxu0 %v1349
        %1746 = vmatprep.subr.bf16.mxu0 0
        %1747 = vmatpush1.bf16.msra.mxu0 %v1348
        %1748 = vmatprep.subr.bf16.mxu0 0
        %1749 = vmatpush1.bf16.msra.mxu0 %v1347
        %1750 = vmatprep.subr.bf16.mxu0 0
        %1751 = vmatpush1.bf16.msra.mxu0 %v1346
        %1752 = vmatprep.subr.bf16.mxu0 0
        %1753 = vmatpush1.bf16.msra.mxu0 %v1345
        %1754 = vmatprep.subr.bf16.mxu0 0
        %1755 = vmatpush1.bf16.msra.mxu0 %v1344
        %1756 = vmatprep.subr.bf16.mxu0 0
        %1757 = vmatpush1.bf16.msra.mxu0 %v1343
        %1758 = vmatprep.subr.bf16.mxu0 0
        %1759 = vmatpush1.bf16.msra.mxu0 %v1342
        %1760 = vmatprep.subr.bf16.mxu0 0
        %1761 = vmatpush2.bf16.msra.mxu0 %v1357
        %1762 = vmatprep.subr.bf16.mxu0 0
        %1763 = vmatpush2.bf16.msra.mxu0 %v1356
        %1764 = vmatprep.subr.bf16.mxu0 0
        %1765 = vmatpush2.bf16.msra.mxu0 %v1355
        %1766 = vmatprep.subr.bf16.mxu0 0
        %1767 = vmatpush2.bf16.msra.mxu0 %v1354
        %1768 = vmatprep.subr.bf16.mxu0 0
        %1769 = vmatpush2.bf16.msra.mxu0 %v1353
        %1770 = vmatprep.subr.bf16.mxu0 0
        %1771 = vmatpush2.bf16.msra.mxu0 %v1352
        %1772 = vmatprep.subr.bf16.mxu0 0
        %1773 = vmatpush2.bf16.msra.mxu0 %v1351
        %1774 = vmatprep.subr.bf16.mxu0 0
        %1775 = vmatpush2.bf16.msra.mxu0 %v1350
        %1776 = vmatprep.mubr.bf16.mxu0 %v867
        %1777 = vmatmul.mubr.bf16.gmra.mxu0 %v866
        %v1778 = vpop.f32.mrf.mxu0
        %v1779 = vadd.f32 %v1618, %v1778
        %v1780 = vpop.f32.mrf.mxu0
        %v1781 = vpop.f32.mrf.mxu0
        %v1782 = vadd.f32 %v1621, %v1781
        %v1783 = vpop.f32.mrf.mxu0
        %1784 = vmatprep.mubr.bf16.mxu0 %v874
        %1785 = vmatmul.mubr.bf16.gmra.mxu0 %v873
        %v1786 = vpop.f32.mrf.mxu0
        %v1787 = vadd.f32 %v1626, %v1786
        %v1788 = vpop.f32.mrf.mxu0
        %v1789 = vpop.f32.mrf.mxu0
        %v1790 = vadd.f32 %v1629, %v1789
        %v1791 = vpop.f32.mrf.mxu0
        %1792 = vmatprep.mubr.bf16.mxu0 %v881
        %1793 = vmatmul.mubr.bf16.gmra.mxu0 %v880
        %v1794 = vpop.f32.mrf.mxu0
        %v1795 = vadd.f32 %v1634, %v1794
        %v1796 = vpop.f32.mrf.mxu0
        %v1797 = vpop.f32.mrf.mxu0
        %v1798 = vadd.f32 %v1637, %v1797
        %v1799 = vpop.f32.mrf.mxu0
        %1800 = vmatprep.mubr.bf16.mxu0 %v888
        %1801 = vmatmul.mubr.bf16.gmra.mxu0 %v887
        %v1802 = vpop.f32.mrf.mxu0
        %v1803 = vadd.f32 %v1642, %v1802
        %v1804 = vpop.f32.mrf.mxu0
        %v1805 = vpop.f32.mrf.mxu0
        %v1806 = vadd.f32 %v1645, %v1805
        %v1807 = vpop.f32.mrf.mxu0
        %1808 = vmatprep.mubr.bf16.mxu0 %v895
        %1809 = vmatmul.mubr.bf16.gmra.mxu0 %v894
        %v1810 = vpop.f32.mrf.mxu0
        %v1811 = vadd.f32 %v1650, %v1810
        %v1812 = vpop.f32.mrf.mxu0
        %v1813 = vpop.f32.mrf.mxu0
        %v1814 = vadd.f32 %v1653, %v1813
        %v1815 = vpop.f32.mrf.mxu0
        %1816 = vmatprep.mubr.bf16.mxu0 %v902
        %1817 = vmatmul.mubr.bf16.gmra.mxu0 %v901
        %v1818 = vpop.f32.mrf.mxu0
        %v1819 = vadd.f32 %v1658, %v1818
        %v1820 = vpop.f32.mrf.mxu0
        %v1821 = vpop.f32.mrf.mxu0
        %v1822 = vadd.f32 %v1661, %v1821
        %v1823 = vpop.f32.mrf.mxu0
        %1824 = vmatprep.mubr.bf16.mxu0 %v909
        %1825 = vmatmul.mubr.bf16.gmra.mxu0 %v908
        %v1826 = vpop.f32.mrf.mxu0
        %v1827 = vadd.f32 %v1666, %v1826
        %v1828 = vpop.f32.mrf.mxu0
        %v1829 = vpop.f32.mrf.mxu0
        %v1830 = vadd.f32 %v1669, %v1829
        %v1831 = vpop.f32.mrf.mxu0
        %1832 = vmatprep.mubr.bf16.mxu0 %v916
        %1833 = vmatmul.mubr.bf16.gmra.mxu0 %v915
        %v1834 = vpop.f32.mrf.mxu0
        %v1835 = vadd.f32 %v1674, %v1834
        %v1836 = vpop.f32.mrf.mxu0
        %v1837 = vpop.f32.mrf.mxu0
        %v1838 = vadd.f32 %v1677, %v1837
        %v1839 = vpop.f32.mrf.mxu0
        %1840 = vmatprep.mubr.bf16.mxu0 %v923
        %1841 = vmatmul.mubr.bf16.gmra.mxu0 %v922
        %v1842 = vpop.f32.mrf.mxu0
        %v1843 = vadd.f32 %v1682, %v1842
        %v1844 = vpop.f32.mrf.mxu0
        %v1845 = vpop.f32.mrf.mxu0
        %v1846 = vadd.f32 %v1685, %v1845
        %v1847 = vpop.f32.mrf.mxu0
        %1848 = vmatprep.mubr.bf16.mxu0 %v930
        %1849 = vmatmul.mubr.bf16.gmra.mxu0 %v929
        %v1850 = vpop.f32.mrf.mxu0
        %v1851 = vadd.f32 %v1690, %v1850
        %v1852 = vpop.f32.mrf.mxu0
        %v1853 = vpop.f32.mrf.mxu0
        %v1854 = vadd.f32 %v1693, %v1853
        %v1855 = vpop.f32.mrf.mxu0
        %1856 = vmatprep.mubr.bf16.mxu0 %v937
        %1857 = vmatmul.mubr.bf16.gmra.mxu0 %v936
        %v1858 = vpop.f32.mrf.mxu0
        %v1859 = vadd.f32 %v1698, %v1858
        %v1860 = vpop.f32.mrf.mxu0
        %v1861 = vpop.f32.mrf.mxu0
        %v1862 = vadd.f32 %v1701, %v1861
        %v1863 = vpop.f32.mrf.mxu0
        %1864 = vmatprep.mubr.bf16.mxu0 %v944
        %1865 = vmatmul.mubr.bf16.gmra.mxu0 %v943
        %v1866 = vpop.f32.mrf.mxu0
        %v1867 = vadd.f32 %v1706, %v1866
        %v1868 = vpop.f32.mrf.mxu0
        %v1869 = vpop.f32.mrf.mxu0
        %v1870 = vadd.f32 %v1709, %v1869
        %v1871 = vpop.f32.mrf.mxu0
        %1872 = vmatprep.mubr.bf16.mxu0 %v951
        %1873 = vmatmul.mubr.bf16.gmra.mxu0 %v950
        %v1874 = vpop.f32.mrf.mxu0
        %v1875 = vadd.f32 %v1714, %v1874
        %v1876 = vpop.f32.mrf.mxu0
        %v1877 = vpop.f32.mrf.mxu0
        %v1878 = vadd.f32 %v1717, %v1877
        %v1879 = vpop.f32.mrf.mxu0
        %1880 = vmatprep.mubr.bf16.mxu0 %v958
        %1881 = vmatmul.mubr.bf16.gmra.mxu0 %v957
        %v1882 = vpop.f32.mrf.mxu0
        %v1883 = vadd.f32 %v1722, %v1882
        %v1884 = vpop.f32.mrf.mxu0
        %v1885 = vpop.f32.mrf.mxu0
        %v1886 = vadd.f32 %v1725, %v1885
        %v1887 = vpop.f32.mrf.mxu0
        %1888 = vmatprep.mubr.bf16.mxu0 %v965
        %1889 = vmatmul.mubr.bf16.gmra.mxu0 %v964
        %v1890 = vpop.f32.mrf.mxu0
        %v1891 = vadd.f32 %v1730, %v1890
        %v1892 = vpop.f32.mrf.mxu0
        %v1893 = vpop.f32.mrf.mxu0
        %v1894 = vadd.f32 %v1733, %v1893
        %v1895 = vpop.f32.mrf.mxu0
        %1896 = vmatprep.mubr.bf16.mxu0 %v972
        %1897 = vmatmul.mubr.bf16.gmra.mxu0 %v971
        %v1898 = vpop.f32.mrf.mxu0
        %v1899 = vadd.f32 %v1738, %v1898
        %v1900 = vpop.f32.mrf.mxu0
        %v1901 = vpop.f32.mrf.mxu0
        %v1902 = vadd.f32 %v1741, %v1901
        %v1903 = vpop.f32.mrf.mxu0
        %1904 = vdwg.mxu0
        %1905 = vmatprep.subr.bf16.mxu0 0
        %1906 = vmatpush1.bf16.msra.mxu0 %v1365
        %1907 = vmatprep.subr.bf16.mxu0 0
        %1908 = vmatpush1.bf16.msra.mxu0 %v1364
        %1909 = vmatprep.subr.bf16.mxu0 0
        %1910 = vmatpush1.bf16.msra.mxu0 %v1363
        %1911 = vmatprep.subr.bf16.mxu0 0
        %1912 = vmatpush1.bf16.msra.mxu0 %v1362
        %1913 = vmatprep.subr.bf16.mxu0 0
        %1914 = vmatpush1.bf16.msra.mxu0 %v1361
        %1915 = vmatprep.subr.bf16.mxu0 0
        %1916 = vmatpush1.bf16.msra.mxu0 %v1360
        %1917 = vmatprep.subr.bf16.mxu0 0
        %1918 = vmatpush1.bf16.msra.mxu0 %v1359
        %1919 = vmatprep.subr.bf16.mxu0 0
        %1920 = vmatpush1.bf16.msra.mxu0 %v1358
        %1921 = vmatprep.subr.bf16.mxu0 0
        %1922 = vmatpush2.bf16.msra.mxu0 0
        %1923 = vmatprep.subr.bf16.mxu0 0
        %1924 = vmatpush2.bf16.msra.mxu0 0
        %1925 = vmatprep.subr.bf16.mxu0 0
        %1926 = vmatpush2.bf16.msra.mxu0 0
        %1927 = vmatprep.subr.bf16.mxu0 0
        %1928 = vmatpush2.bf16.msra.mxu0 0
        %1929 = vmatprep.subr.bf16.mxu0 0
        %1930 = vmatpush2.bf16.msra.mxu0 0
        %1931 = vmatprep.subr.bf16.mxu0 0
        %1932 = vmatpush2.bf16.msra.mxu0 0
        %1933 = vmatprep.subr.bf16.mxu0 0
        %1934 = vmatpush2.bf16.msra.mxu0 0
        %1935 = vmatprep.subr.bf16.mxu0 0
        %1936 = vmatpush2.bf16.msra.mxu0 0
        %1937 = vmatprep.mubr.bf16.mxu0 0
        %1938 = vmatmul.mubr.bf16.gmra.mxu0 %v868
        %v1939 = vpop.f32.mrf.mxu0
        %v1940 = vadd.f32 %v1779, %v1939
        %v1941 = vpop.f32.mrf.mxu0
        %v1942 = vpop.f32.mrf.mxu0
        %v1943 = vadd.f32 %v1782, %v1942
        %v1944 = vpop.f32.mrf.mxu0
        %1945 = vmatprep.mubr.bf16.mxu0 0
        %1946 = vmatmul.mubr.bf16.gmra.mxu0 %v875
        %v1947 = vpop.f32.mrf.mxu0
        %v1948 = vadd.f32 %v1787, %v1947
        %v1949 = vpop.f32.mrf.mxu0
        %v1950 = vpop.f32.mrf.mxu0
        %v1951 = vadd.f32 %v1790, %v1950
        %v1952 = vpop.f32.mrf.mxu0
        %1953 = vmatprep.mubr.bf16.mxu0 0
        %1954 = vmatmul.mubr.bf16.gmra.mxu0 %v882
        %v1955 = vpop.f32.mrf.mxu0
        %v1956 = vadd.f32 %v1795, %v1955
        %v1957 = vpop.f32.mrf.mxu0
        %v1958 = vpop.f32.mrf.mxu0
        %v1959 = vadd.f32 %v1798, %v1958
        %v1960 = vpop.f32.mrf.mxu0
        %1961 = vmatprep.mubr.bf16.mxu0 0
        %1962 = vmatmul.mubr.bf16.gmra.mxu0 %v889
        %v1963 = vpop.f32.mrf.mxu0
        %v1964 = vadd.f32 %v1803, %v1963
        %v1965 = vpop.f32.mrf.mxu0
        %v1966 = vpop.f32.mrf.mxu0
        %v1967 = vadd.f32 %v1806, %v1966
        %v1968 = vpop.f32.mrf.mxu0
        %1969 = vmatprep.mubr.bf16.mxu0 0
        %1970 = vmatmul.mubr.bf16.gmra.mxu0 %v896
        %v1971 = vpop.f32.mrf.mxu0
        %v1972 = vadd.f32 %v1811, %v1971
        %v1973 = vpop.f32.mrf.mxu0
        %v1974 = vpop.f32.mrf.mxu0
        %v1975 = vadd.f32 %v1814, %v1974
        %v1976 = vpop.f32.mrf.mxu0
        %1977 = vmatprep.mubr.bf16.mxu0 0
        %1978 = vmatmul.mubr.bf16.gmra.mxu0 %v903
        %v1979 = vpop.f32.mrf.mxu0
        %v1980 = vadd.f32 %v1819, %v1979
        %v1981 = vpop.f32.mrf.mxu0
        %v1982 = vpop.f32.mrf.mxu0
        %v1983 = vadd.f32 %v1822, %v1982
        %v1984 = vpop.f32.mrf.mxu0
        %1985 = vmatprep.mubr.bf16.mxu0 0
        %1986 = vmatmul.mubr.bf16.gmra.mxu0 %v910
        %v1987 = vpop.f32.mrf.mxu0
        %v1988 = vadd.f32 %v1827, %v1987
        %v1989 = vpop.f32.mrf.mxu0
        %v1990 = vpop.f32.mrf.mxu0
        %v1991 = vadd.f32 %v1830, %v1990
        %v1992 = vpop.f32.mrf.mxu0
        %1993 = vmatprep.mubr.bf16.mxu0 0
        %1994 = vmatmul.mubr.bf16.gmra.mxu0 %v917
        %v1995 = vpop.f32.mrf.mxu0
        %v1996 = vadd.f32 %v1835, %v1995
        %v1997 = vpop.f32.mrf.mxu0
        %v1998 = vpop.f32.mrf.mxu0
        %v1999 = vadd.f32 %v1838, %v1998
        %v2000 = vpop.f32.mrf.mxu0
        %2001 = vmatprep.mubr.bf16.mxu0 0
        %2002 = vmatmul.mubr.bf16.gmra.mxu0 %v924
        %v2003 = vpop.f32.mrf.mxu0
        %v2004 = vadd.f32 %v1843, %v2003
        %v2005 = vpop.f32.mrf.mxu0
        %v2006 = vpop.f32.mrf.mxu0
        %v2007 = vadd.f32 %v1846, %v2006
        %v2008 = vpop.f32.mrf.mxu0
        %2009 = vmatprep.mubr.bf16.mxu0 0
        %2010 = vmatmul.mubr.bf16.gmra.mxu0 %v931
        %v2011 = vpop.f32.mrf.mxu0
        %v2012 = vadd.f32 %v1851, %v2011
        %v2013 = vpop.f32.mrf.mxu0
        %v2014 = vpop.f32.mrf.mxu0
        %v2015 = vadd.f32 %v1854, %v2014
        %v2016 = vpop.f32.mrf.mxu0
        %2017 = vmatprep.mubr.bf16.mxu0 0
        %2018 = vmatmul.mubr.bf16.gmra.mxu0 %v938
        %v2019 = vpop.f32.mrf.mxu0
        %v2020 = vadd.f32 %v1859, %v2019
        %v2021 = vpop.f32.mrf.mxu0
        %v2022 = vpop.f32.mrf.mxu0
        %v2023 = vadd.f32 %v1862, %v2022
        %v2024 = vpop.f32.mrf.mxu0
        %2025 = vmatprep.mubr.bf16.mxu0 0
        %2026 = vmatmul.mubr.bf16.gmra.mxu0 %v945
        %v2027 = vpop.f32.mrf.mxu0
        %v2028 = vadd.f32 %v1867, %v2027
        %v2029 = vpop.f32.mrf.mxu0
        %v2030 = vpop.f32.mrf.mxu0
        %v2031 = vadd.f32 %v1870, %v2030
        %v2032 = vpop.f32.mrf.mxu0
        %2033 = vmatprep.mubr.bf16.mxu0 0
        %2034 = vmatmul.mubr.bf16.gmra.mxu0 %v952
        %v2035 = vpop.f32.mrf.mxu0
        %v2036 = vadd.f32 %v1875, %v2035
        %v2037 = vpop.f32.mrf.mxu0
        %v2038 = vpop.f32.mrf.mxu0
        %v2039 = vadd.f32 %v1878, %v2038
        %v2040 = vpop.f32.mrf.mxu0
        %2041 = vmatprep.mubr.bf16.mxu0 0
        %2042 = vmatmul.mubr.bf16.gmra.mxu0 %v959
        %v2043 = vpop.f32.mrf.mxu0
        %v2044 = vadd.f32 %v1883, %v2043
        %v2045 = vpop.f32.mrf.mxu0
        %v2046 = vpop.f32.mrf.mxu0
        %v2047 = vadd.f32 %v1886, %v2046
        %v2048 = vpop.f32.mrf.mxu0
        %2049 = vmatprep.mubr.bf16.mxu0 0
        %2050 = vmatmul.mubr.bf16.gmra.mxu0 %v966
        %v2051 = vpop.f32.mrf.mxu0
        %v2052 = vadd.f32 %v1891, %v2051
        %v2053 = vpop.f32.mrf.mxu0
        %v2054 = vpop.f32.mrf.mxu0
        %v2055 = vadd.f32 %v1894, %v2054
        %v2056 = vpop.f32.mrf.mxu0
        %2057 = vmatprep.mubr.bf16.mxu0 0
        %2058 = vmatmul.mubr.bf16.gmra.mxu0 %v973
        %v2059 = vpop.f32.mrf.mxu0
        %v2060 = vadd.f32 %v1899, %v2059
        %v2061 = vpop.f32.mrf.mxu0
        %v2062 = vpop.f32.mrf.mxu0
        %v2063 = vadd.f32 %v1902, %v2062
        %v2064 = vpop.f32.mrf.mxu0
        %2065 = vdwg.mxu0
        %vm2066 = vcmp.gt.f32.partialorder %v1940, 0.0
        %vm2067 = vcmp.gt.f32.partialorder %v1943, 0.0
        %vm2068 = vcmp.gt.f32.partialorder %v1948, 0.0
        %vm2069 = vcmp.gt.f32.partialorder %v1951, 0.0
        %vm2070 = vcmp.gt.f32.partialorder %v1956, 0.0
        %vm2071 = vcmp.gt.f32.partialorder %v1959, 0.0
        %vm2072 = vcmp.gt.f32.partialorder %v1964, 0.0
        %vm2073 = vcmp.gt.f32.partialorder %v1967, 0.0
        %vm2074 = vcmp.gt.f32.partialorder %v1972, 0.0
        %vm2075 = vcmp.gt.f32.partialorder %v1975, 0.0
        %vm2076 = vcmp.gt.f32.partialorder %v1980, 0.0
        %vm2077 = vcmp.gt.f32.partialorder %v1983, 0.0
        %vm2078 = vcmp.gt.f32.partialorder %v1988, 0.0
        %vm2079 = vcmp.gt.f32.partialorder %v1991, 0.0
        %vm2080 = vcmp.gt.f32.partialorder %v1996, 0.0
        %vm2081 = vcmp.gt.f32.partialorder %v1999, 0.0
        %vm2082 = vcmp.gt.f32.partialorder %v2004, 0.0
        %vm2083 = vcmp.gt.f32.partialorder %v2007, 0.0
        %vm2084 = vcmp.gt.f32.partialorder %v2012, 0.0
        %vm2085 = vcmp.gt.f32.partialorder %v2015, 0.0
        %vm2086 = vcmp.gt.f32.partialorder %v2020, 0.0
        %vm2087 = vcmp.gt.f32.partialorder %v2023, 0.0
        %vm2088 = vcmp.gt.f32.partialorder %v2028, 0.0
        %vm2089 = vcmp.gt.f32.partialorder %v2031, 0.0
        %vm2090 = vcmp.gt.f32.partialorder %v2036, 0.0
        %vm2091 = vcmp.gt.f32.partialorder %v2039, 0.0
        %vm2092 = vcmp.gt.f32.partialorder %v2044, 0.0
        %vm2093 = vcmp.gt.f32.partialorder %v2047, 0.0
        %vm2094 = vcmp.gt.f32.partialorder %v2052, 0.0
        %vm2095 = vcmp.gt.f32.partialorder %v2055, 0.0
        %vm2096 = vcmp.gt.f32.partialorder %v2060, 0.0
        %vm2097 = vcmp.gt.f32.partialorder %v2063, 0.0
        %v2098 = vmul.f32 %v1940, 0.01
        %v2099 = vmul.f32 %v1943, 0.01
        %v2100 = vmul.f32 %v1948, 0.01
        %v2101 = vmul.f32 %v1951, 0.01
        %v2102 = vmul.f32 %v1956, 0.01
        %v2103 = vmul.f32 %v1959, 0.01
        %v2104 = vmul.f32 %v1964, 0.01
        %v2105 = vmul.f32 %v1967, 0.01
        %v2106 = vmul.f32 %v1972, 0.01
        %v2107 = vmul.f32 %v1975, 0.01
        %v2108 = vmul.f32 %v1980, 0.01
        %v2109 = vmul.f32 %v1983, 0.01
        %v2110 = vmul.f32 %v1988, 0.01
        %v2111 = vmul.f32 %v1991, 0.01
        %v2112 = vmul.f32 %v1996, 0.01
        %v2113 = vmul.f32 %v1999, 0.01
        %v2114 = vmul.f32 %v2004, 0.01
        %v2115 = vmul.f32 %v2007, 0.01
        %v2116 = vmul.f32 %v2012, 0.01
        %v2117 = vmul.f32 %v2015, 0.01
        %v2118 = vmul.f32 %v2020, 0.01
        %v2119 = vmul.f32 %v2023, 0.01
        %v2120 = vmul.f32 %v2028, 0.01
        %v2121 = vmul.f32 %v2031, 0.01
        %v2122 = vmul.f32 %v2036, 0.01
        %v2123 = vmul.f32 %v2039, 0.01
        %v2124 = vmul.f32 %v2044, 0.01
        %v2125 = vmul.f32 %v2047, 0.01
        %v2126 = vmul.f32 %v2052, 0.01
        %v2127 = vmul.f32 %v2055, 0.01
        %v2128 = vmul.f32 %v2060, 0.01
        %v2129 = vmul.f32 %v2063, 0.01
        %v2130 = vsel %vm2066, %v1940, %v2098
        %v2131 = vsel %vm2067, %v1943, %v2099
        %v2132 = vsel %vm2068, %v1948, %v2100
        %v2133 = vsel %vm2069, %v1951, %v2101
        %v2134 = vsel %vm2070, %v1956, %v2102
        %v2135 = vsel %vm2071, %v1959, %v2103
        %v2136 = vsel %vm2072, %v1964, %v2104
        %v2137 = vsel %vm2073, %v1967, %v2105
        %v2138 = vsel %vm2074, %v1972, %v2106
        %v2139 = vsel %vm2075, %v1975, %v2107
        %v2140 = vsel %vm2076, %v1980, %v2108
        %v2141 = vsel %vm2077, %v1983, %v2109
        %v2142 = vsel %vm2078, %v1988, %v2110
        %v2143 = vsel %vm2079, %v1991, %v2111
        %v2144 = vsel %vm2080, %v1996, %v2112
        %v2145 = vsel %vm2081, %v1999, %v2113
        %v2146 = vsel %vm2082, %v2004, %v2114
        %v2147 = vsel %vm2083, %v2007, %v2115
        %v2148 = vsel %vm2084, %v2012, %v2116
        %v2149 = vsel %vm2085, %v2015, %v2117
        %v2150 = vsel %vm2086, %v2020, %v2118
        %v2151 = vsel %vm2087, %v2023, %v2119
        %v2152 = vsel %vm2088, %v2028, %v2120
        %v2153 = vsel %vm2089, %v2031, %v2121
        %v2154 = vsel %vm2090, %v2036, %v2122
        %v2155 = vsel %vm2091, %v2039, %v2123
        %v2156 = vsel %vm2092, %v2044, %v2124
        %v2157 = vsel %vm2093, %v2047, %v2125
        %v2158 = vsel %vm2094, %v2052, %v2126
        %v2159 = vsel %vm2095, %v2055, %v2127
        %v2160 = vsel %vm2096, %v2060, %v2128
        %v2161 = vsel %vm2097, %v2063, %v2129
        %v2162 = vld [vmem:[%s3] sm:$0x1]
        %v2164 = vlaneseq
        %v2165 = vshrl.u32 %v2164, 7
        %v2166 = vsub.s32 0, %v2165
        %v2167 = vrot.slane %v2162, %v2166
        %v2169 = vmul.f32 %v2130, %v2167
        %v2170 = vmul.f32 %v2131, %v2167
        %v2171 = vmul.f32 %v2132, %v2167
        %v2172 = vmul.f32 %v2133, %v2167
        %v2173 = vmul.f32 %v2134, %v2167
        %v2174 = vmul.f32 %v2135, %v2167
        %v2175 = vmul.f32 %v2136, %v2167
        %v2176 = vmul.f32 %v2137, %v2167
        %v2177 = vmul.f32 %v2138, %v2167
        %v2178 = vmul.f32 %v2139, %v2167
        %v2179 = vmul.f32 %v2140, %v2167
        %v2180 = vmul.f32 %v2141, %v2167
        %v2181 = vmul.f32 %v2142, %v2167
        %v2182 = vmul.f32 %v2143, %v2167
        %v2183 = vmul.f32 %v2144, %v2167
        %v2184 = vmul.f32 %v2145, %v2167
        %v2185 = vmul.f32 %v2146, %v2167
        %v2186 = vmul.f32 %v2147, %v2167
        %v2187 = vmul.f32 %v2148, %v2167
        %v2188 = vmul.f32 %v2149, %v2167
        %v2189 = vmul.f32 %v2150, %v2167
        %v2190 = vmul.f32 %v2151, %v2167
        %v2191 = vmul.f32 %v2152, %v2167
        %v2192 = vmul.f32 %v2153, %v2167
        %v2193 = vmul.f32 %v2154, %v2167
        %v2194 = vmul.f32 %v2155, %v2167
        %v2195 = vmul.f32 %v2156, %v2167
        %v2196 = vmul.f32 %v2157, %v2167
        %v2197 = vmul.f32 %v2158, %v2167
        %v2198 = vmul.f32 %v2159, %v2167
        %v2199 = vmul.f32 %v2160, %v2167
        %v2200 = vmul.f32 %v2161, %v2167
        %2201 = vxpose.xlu0.b32.start [1/16] %v2169, 128
        %2202 = vxpose.xlu0.b32.cont [2/16] %v2170, 128
        %2203 = vxpose.xlu0.b32.cont [3/16] %v2171, 128
        %2204 = vxpose.xlu0.b32.cont [4/16] %v2172, 128
        %2205 = vxpose.xlu0.b32.cont [5/16] %v2173, 128
        %2206 = vxpose.xlu0.b32.cont [6/16] %v2174, 128
        %2207 = vxpose.xlu0.b32.cont [7/16] %v2175, 128
        %2208 = vxpose.xlu0.b32.cont [8/16] %v2176, 128
        %2209 = vxpose.xlu0.b32.cont [9/16] %v2177, 128
        %2210 = vxpose.xlu0.b32.cont [10/16] %v2178, 128
        %2211 = vxpose.xlu0.b32.cont [11/16] %v2179, 128
        %2212 = vxpose.xlu0.b32.cont [12/16] %v2180, 128
        %2213 = vxpose.xlu0.b32.cont [13/16] %v2181, 128
        %2214 = vxpose.xlu0.b32.cont [14/16] %v2182, 128
        %2215 = vxpose.xlu0.b32.cont [15/16] %v2183, 128
        %2216 = vxpose.xlu0.b32.end [16/16] %v2184, 128
        %v2217 = vpop.trf.xlu0
        %v2218 = vpop.trf.xlu0
        %v2219 = vpop.trf.xlu0
        %v2220 = vpop.trf.xlu0
        %v2221 = vpop.trf.xlu0
        %v2222 = vpop.trf.xlu0
        %v2223 = vpop.trf.xlu0
        %v2224 = vpop.trf.xlu0
        %v2225 = vpop.trf.xlu0
        %v2226 = vpop.trf.xlu0
        %v2227 = vpop.trf.xlu0
        %v2228 = vpop.trf.xlu0
        %v2229 = vpop.trf.xlu0
        %v2230 = vpop.trf.xlu0
        %v2231 = vpop.trf.xlu0
        %v2232 = vpop.trf.xlu0
        %2233 = vxpose.xlu0.b32.start [1/16] %v2185, 128
        %2234 = vxpose.xlu0.b32.cont [2/16] %v2186, 128
        %2235 = vxpose.xlu0.b32.cont [3/16] %v2187, 128
        %2236 = vxpose.xlu0.b32.cont [4/16] %v2188, 128
        %2237 = vxpose.xlu0.b32.cont [5/16] %v2189, 128
        %2238 = vxpose.xlu0.b32.cont [6/16] %v2190, 128
        %2239 = vxpose.xlu0.b32.cont [7/16] %v2191, 128
        %2240 = vxpose.xlu0.b32.cont [8/16] %v2192, 128
        %2241 = vxpose.xlu0.b32.cont [9/16] %v2193, 128
        %2242 = vxpose.xlu0.b32.cont [10/16] %v2194, 128
        %2243 = vxpose.xlu0.b32.cont [11/16] %v2195, 128
        %2244 = vxpose.xlu0.b32.cont [12/16] %v2196, 128
        %2245 = vxpose.xlu0.b32.cont [13/16] %v2197, 128
        %2246 = vxpose.xlu0.b32.cont [14/16] %v2198, 128
        %2247 = vxpose.xlu0.b32.cont [15/16] %v2199, 128
        %2248 = vxpose.xlu0.b32.end [16/16] %v2200, 128
        %v2249 = vpop.trf.xlu0
        %v2250 = vpop.trf.xlu0
        %v2251 = vpop.trf.xlu0
        %v2252 = vpop.trf.xlu0
        %v2253 = vpop.trf.xlu0
        %v2254 = vpop.trf.xlu0
        %v2255 = vpop.trf.xlu0
        %v2256 = vpop.trf.xlu0
        %v2257 = vpop.trf.xlu0
        %v2258 = vpop.trf.xlu0
        %v2259 = vpop.trf.xlu0
        %v2260 = vpop.trf.xlu0
        %v2261 = vpop.trf.xlu0
        %v2262 = vpop.trf.xlu0
        %v2263 = vpop.trf.xlu0
        %v2264 = vpop.trf.xlu0
        %v2265 = vadd.f32 %v2217, %v2218
        %v2266 = vadd.f32 %v2265, %v2219
        %v2267 = vadd.f32 %v2266, %v2220
        %v2268 = vadd.f32 %v2267, %v2221
        %v2269 = vadd.f32 %v2268, %v2222
        %v2270 = vadd.f32 %v2269, %v2223
        %v2271 = vadd.f32 %v2270, %v2224
        %v2272 = vadd.f32 %v2271, %v2225
        %v2273 = vadd.f32 %v2272, %v2226
        %v2274 = vadd.f32 %v2273, %v2227
        %v2275 = vadd.f32 %v2274, %v2228
        %v2276 = vadd.f32 %v2275, %v2229
        %v2277 = vadd.f32 %v2276, %v2230
        %v2278 = vadd.f32 %v2277, %v2231
        %v2279 = vadd.f32 %v2278, %v2232
        %v2280 = vrot.slane %v2279, 4
        %v2281 = vadd.f32 %v2279, %v2280
        %v2282 = vrot.slane %v2281, 2
        %v2283 = vadd.f32 %v2281, %v2282
        %v2284 = vrot.slane %v2283, 1
        %v2285 = vadd.f32 %v2283, %v2284
        %v2286 = vadd.f32 %v2249, %v2250
        %v2287 = vadd.f32 %v2286, %v2251
        %v2288 = vadd.f32 %v2287, %v2252
        %v2289 = vadd.f32 %v2288, %v2253
        %v2290 = vadd.f32 %v2289, %v2254
        %v2291 = vadd.f32 %v2290, %v2255
        %v2292 = vadd.f32 %v2291, %v2256
        %v2293 = vadd.f32 %v2292, %v2257
        %v2294 = vadd.f32 %v2293, %v2258
        %v2295 = vadd.f32 %v2294, %v2259
        %v2296 = vadd.f32 %v2295, %v2260
        %v2297 = vadd.f32 %v2296, %v2261
        %v2298 = vadd.f32 %v2297, %v2262
        %v2299 = vadd.f32 %v2298, %v2263
        %v2300 = vadd.f32 %v2299, %v2264
        %v2301 = vrot.slane %v2300, 4
        %v2302 = vadd.f32 %v2300, %v2301
        %v2303 = vrot.slane %v2302, 2
        %v2304 = vadd.f32 %v2302, %v2303
        %v2305 = vrot.slane %v2304, 1
        %v2306 = vadd.f32 %v2304, %v2305
        %s2307 = sld [smem:[#allocation2]]
        %v2308 = vstv %s2307
        %v2309 = vadd.f32 %v2285, %v2308
        %v2310 = vadd.f32 %v2306, %v2308
        %v2311 = vsub.f32 0.0, %v2309
        %v2312 = vsub.f32 0.0, %v2310
        %v2313 = vmul.f32 %v2311, 1.442695
        %v2314 = vpow.pop %v2313
        %v2315 = vmul.f32 %v2312, 1.442695
        %v2316 = vpow.pop %v2315
        %v2317 = vadd.f32 %v2314, 1.0
        %v2318 = vadd.f32 %v2316, 1.0
        %v2319 = vrcp.pop %v2317
        %v2320 = vrcp.pop %v2318
        %v2323 = vcombine.low %v2319, %v2320
        %v2325 = vunpack.c.l.s4 1966171168
        %v2326 = vunpack.c.0.s8 %v2325
        %v2327 = vlaneseq
        %v2328 = vshrl.u32 %v2327, 7
        %v2329 = vsub.s32 %v2326, %v2328
        %v2330 = vrot.slane %v2323, %v2329
        %v2332 = vunpack.c.l.s4 1966171168
        %v2333 = vunpack.c.0.s8 %v2332
        %v2334 = vlaneseq
        %v2335 = vshrl.u32 %v2334, 7
        %v2336 = vsub.s32 %v2333, %v2335
        %v2337 = vrot.slane %v2330, %v2336
        %v2339 = vlaneseq
        %vm2340 = vcmp.ge.s32.totalorder %v2339, 0
        %vm2341 = vcmp.lt.s32.totalorder %v2339, 256
        %vm2342 = vmand %vm2340, %vm2341
        %2343 = vst.msk [vmem:[%s259] sm:$0x3] %vm2342, %v2337
        %s2344 = sand.u32 %s142, 1
        %s2345 = scalar_lea.sflag [#allocation5], %s2344
        %s2346 = sand.u32 %s142, 1
        %s2347 = smul.addr %s2346, 2
        %s2348 = scalar_lea.vmem [#allocation8], %s2347
        // Predicated region
        $region49: #{tpu_custom_call.1} parent=39 // pred_check
          %p2349 = pneg %p152
        $region50: #{tpu_custom_call.1} parent=39 // pred_check_branch
          %2351 = sbr.rel (%p2349) target = $region52
        $region51: #{tpu_custom_call.1} parent=39 // pred_region
          %s2352 = smul.u32 2, %s24
          %s2354 = ssub.s32 32, 32
          %2355 = vsyncadd %s2345, %s2354
          %s2356 = smul.addr %s2352, 16
          %s2357 = scalar_lea.hbm %s5, %s2356
          %s2359 = sshll.u32 %s2348, 4
          %s2360 = int_to_ptr.vmem [resolvable:$true] %s2359
          %2362 = dma.vmem_to_hbm [thread:$0]  %s2360, 32, %s2357, %s2345
        $region52: #{tpu_custom_call.1} parent=39 // pred_fallthru
          _
      $region40: #{tpu_custom_call.1} parent=5 // pred_fallthru
        _
      %p2363 = scmp.le.s32.totalorder 2, %s19
      // Predicated region
      $region53: #{tpu_custom_call.1} parent=5 // pred_check
        %p2364 = pneg %p2363
      $region54: #{tpu_custom_call.1} parent=5 // pred_check_branch
        %2366 = sbr.rel (%p2364) target = $region56
      $region55: #{tpu_custom_call.1} parent=5 // pred_region
        %s2367 = ssub.s32 %s19, 2
        // Predicated region
        $region57: #{tpu_custom_call.1} parent=55 // pred_check
          %p2368 = pneg %p158
        $region58: #{tpu_custom_call.1} parent=55 // pred_check_branch
          %2370 = sbr.rel (%p2368) target = $region60
        $region59: #{tpu_custom_call.1} parent=55 // pred_region
          %s2371 = sand.u32 %s143, 1
          %s2372 = scalar_lea.sflag [#allocation5], %s2371
          %s2373 = sand.u32 %s143, 1
          %s2374 = smul.addr %s2373, 2
          %s2375 = scalar_lea.vmem [#allocation8], %s2374
          %2376 = dma.done %s2372, 32
        $region60: #{tpu_custom_call.1} parent=55 // pred_fallthru
          _
      $region56: #{tpu_custom_call.1} parent=5 // pred_fallthru
        _
    $region6: #{tpu_custom_call.1} parent=1 // loop_footer
      %s23 = sadd.s32 1, %s19
    $region7: #{tpu_custom_call.1} parent=1 // loop_footer_branch
      %18 = sbr.rel target = $region3
    $region8: #{tpu_custom_call.1} parent=1 // loop_exit
      _
    %2377 = vsyncpa [#allocation4], 1
    %s2378 = scalar_lea.sflag [#allocation4], 1
    %2379 = vsyncpa %s2378, 1
    %2380 = vsyncpa [#allocation7], 1
    %2381 = vsyncpa [#allocation5], 1
    %s2382 = scalar_lea.sflag [#allocation5], 1
    %2383 = vsyncpa %s2382, 1

</llo_original>
